<compile_context>
chip_gen: v6e
topology: v6e:2x2x1
jax: 0.10.0
libtpu: 0.0.40
codegen_flags: <defaults>
</compile_context>

<pallas_src>
import functools

import jax
import jax.numpy as jnp
from jax.experimental import pallas as pl
from jax.experimental.pallas import tpu as pltpu

_LANE = 128  # lane width: hidden / output feature dims padded to multiples of this


def _round_up(x, m):
    return (x + m - 1) // m * m


def _mlp_kernel(x_ref, w1_ref, b1_ref, w2_ref, b2_ref, o_ref):
    # x_ref : (TB, K)        activation tile (streamed / pipelined)
    # w1_ref: (K, H_pad)     VMEM-resident (constant index_map)
    # b1_ref: (1, H_pad)     f32
    # w2_ref: (H_pad, N_pad) VMEM-resident
    # b2_ref: (1, N_pad)     f32
    # o_ref : (TB, N_pad)
    # For the f32 path use HIGHEST precision so the MXU result matches a true
    # f32 matmul (and the highest-precision XLA reference).  bf16 inputs use the
    # native single-pass MXU.
    prec = (jax.lax.Precision.HIGHEST if x_ref.dtype == jnp.float32
            else jax.lax.Precision.DEFAULT)
    h = jnp.dot(x_ref[...], w1_ref[...],
                preferred_element_type=jnp.float32, precision=prec)
    h = jnp.maximum(h + b1_ref[...], 0.0)                    # bias + ReLU in f32 (VPU)
    out = jnp.dot(h.astype(w2_ref.dtype), w2_ref[...],
                  preferred_element_type=jnp.float32, precision=prec)
    out = out + b2_ref[...]
    o_ref[...] = out.astype(o_ref.dtype)


def prepare_params(w1, b1, w2, b2, *, dtype=jnp.float32):
    """One-time preprocessing of PyTorch-layout Linear params.

    w1: (hidden, input), b1: (hidden,), w2: (out, hidden), b2: (out,)
    Returns (K, H_pad)/(H_pad, N_pad) pre-transposed weights with hidden/output
    lane-padded to 128 (input K stays unpadded), f32 biases, and true out_size.
    `dtype` controls the streamed/resident weight dtype (jnp.bfloat16 enables the
    halved-bandwidth path; accumulation stays f32 either way).
    """
    hidden_size, input_size = w1.shape
    out_size = w2.shape[0]
    h_pad = _round_up(hidden_size, _LANE)
    n_pad = _round_up(out_size, _LANE)

    w1_t = jnp.zeros((input_size, h_pad), dtype).at[:, :hidden_size].set(
        w1.T.astype(dtype))
    b1_p = jnp.zeros((1, h_pad), jnp.float32).at[0, :hidden_size].set(
        b1.astype(jnp.float32))
    w2_t = jnp.zeros((h_pad, n_pad), dtype).at[:hidden_size, :out_size].set(
        w2.T.astype(dtype))
    b2_p = jnp.zeros((1, n_pad), jnp.float32).at[0, :out_size].set(
        b2.astype(jnp.float32))
    return w1_t, b1_p, w2_t, b2_p, out_size


@functools.partial(jax.jit, static_argnames=("out_size", "block_b"))
def mnist_model_forward(xb, w1_t, b1_p, w2_t, b2_p, *, out_size, block_b=512):
    """Forward pass identical to MnistModel.forward.

    xb: (B, C, H, W) (any float dtype).  Weights must come from prepare_params().
    Returns logits (B, out_size) in the compute dtype (f32 or bf16).
    """
    B = xb.shape[0]
    dtype = w1_t.dtype
    x_flat = xb.reshape(B, -1).astype(dtype)        # xb.view(xb.size(0), -1)
    k = x_flat.shape[1]
    if k != w1_t.shape[0]:
        raise ValueError(f"input_size mismatch: x has {k}, weights expect {w1_t.shape[0]}")
    h_pad = w1_t.shape[1]
    n_pad = w2_t.shape[1]

    # Batch tile selection:
    #  * tile rows are a multiple of the sublane quantum (8 for f32, 16 for bf16)
    #    unless a single tile covers the whole batch (block dim == full dim is legal),
    #  * grid = cdiv(B, tb): the last tile may be partial (out-of-range rows are
    #    garbage reads / masked writes; rows are independent so this is safe),
    #  * at least 2 tiles whenever B >= 2 sublanes so both v7x TensorCores get work.
    sub = 8 if jnp.dtype(dtype).itemsize >= 4 else 16
    n_tiles = max(2 if B >= 2 * sub else 1, pl.cdiv(B, block_b))
    if n_tiles == 1:
        tb = B
    else:
        tb = _round_up(pl.cdiv(B, n_tiles), sub)
    grid = (pl.cdiv(B, tb),)

    in_dsize = jnp.dtype(dtype).itemsize
    flops = 2 * B * (k * h_pad + h_pad * n_pad)
    bytes_accessed = int((B * k + k * h_pad + h_pad * n_pad + B * n_pad) * in_dsize
                         + (h_pad + n_pad) * 4)

    # Explicit scoped-VMEM limit: double-buffered x/out streams + resident weights
    # + headroom.  v5e's default scoped limit is only 16 MiB.
    vmem_need = (2 * tb * (k + n_pad) * in_dsize
                 + 2 * (k * h_pad + h_pad * n_pad) * in_dsize
                 + 2 * (h_pad + n_pad) * 4)
    vmem_limit = int(min(96 << 20, max(32 << 20, vmem_need + (4 << 20))))

    out = pl.pallas_call(
        _mlp_kernel,
        out_shape=jax.ShapeDtypeStruct((B, n_pad), dtype),
        grid=grid,
        in_specs=[
            # Activation stream: one batch tile per grid step (double-buffered).
            pl.BlockSpec((tb, k), lambda i: (i, 0)),
            # Weights/biases: constant block index -> DMA'd once, VMEM-resident.
            pl.BlockSpec((k, h_pad), lambda i: (0, 0)),
            pl.BlockSpec((1, h_pad), lambda i: (0, 0)),
            pl.BlockSpec((h_pad, n_pad), lambda i: (0, 0)),
            pl.BlockSpec((1, n_pad), lambda i: (0, 0)),
        ],
        out_specs=pl.BlockSpec((tb, n_pad), lambda i: (i, 0)),
        compiler_params=pltpu.CompilerParams(
            dimension_semantics=("parallel",),
            vmem_limit_bytes=vmem_limit,
        ),
        cost_estimate=pl.CostEstimate(
            flops=flops, transcendentals=0, bytes_accessed=bytes_accessed),
    )(x_flat, w1_t, b1_p, w2_t, b2_p)

    # Drop the padded (zero-bias, unused) logit lanes.
    return out[:, :out_size]


def init_params(key, input_size, hidden_size, out_size):
    """Deterministic init mimicking PyTorch nn.Linear default (uniform +/- 1/sqrt(fan_in))."""
    k1, k2, k3, k4 = jax.random.split(key, 4)
    bound1 = 1.0 / jnp.sqrt(input_size)
    bound2 = 1.0 / jnp.sqrt(hidden_size)
    w1 = jax.random.uniform(k1, (hidden_size, input_size), jnp.float32, -bound1, bound1)
    b1 = jax.random.uniform(k2, (hidden_size,), jnp.float32, -bound1, bound1)
    w2 = jax.random.uniform(k3, (out_size, hidden_size), jnp.float32, -bound2, bound2)
    b2 = jax.random.uniform(k4, (out_size,), jnp.float32, -bound2, bound2)
    return w1, b1, w2, b2


if __name__ == "__main__":
    key = jax.random.PRNGKey(0)
    k_x, k_p = jax.random.split(key)

    # Small MNIST-like shapes: batch=2, 1 channel, 16x16 images -> input_size=256.
    B, C, H, W = 2, 1, 16, 16
    input_size = C * H * W
    hidden_size = 32
    out_size = 10

    xb = jax.random.normal(k_x, (B, C, H, W), jnp.float32)
    w1, b1, w2, b2 = init_params(k_p, input_size, hidden_size, out_size)

    # Pure-JAX reference of the same forward pass (full f32 matmul precision).
    x_flat = xb.reshape(B, -1)
    hidden = jnp.maximum(
        jnp.dot(x_flat, w1.T, precision=jax.lax.Precision.HIGHEST) + b1, 0.0)
    ref = jnp.dot(hidden, w2.T, precision=jax.lax.Precision.HIGHEST) + b2

    # --- f32 path (matches the PyTorch reference) ---
    w1_t, b1_p, w2_t, b2_p, n_out = prepare_params(w1, b1, w2, b2, dtype=jnp.float32)
    logits = mnist_model_forward(xb, w1_t, b1_p, w2_t, b2_p, out_size=n_out)
    logits = jax.block_until_ready(logits)
    assert logits.shape == (B, out_size)
    assert jnp.allclose(logits, ref, atol=1e-4, rtol=1e-4)

    # --- bf16 streaming path (bandwidth-optimized; f32 accumulation) ---
    w1_b, b1_b, w2_b, b2_b, _ = prepare_params(w1, b1, w2, b2, dtype=jnp.bfloat16)
    logits_bf16 = mnist_model_forward(xb, w1_b, b1_b, w2_b, b2_b, out_size=n_out)
    logits_bf16 = jax.block_until_ready(logits_bf16)
    assert logits_bf16.shape == (B, out_size)
    assert jnp.allclose(logits_bf16.astype(jnp.float32), ref, atol=1e-1, rtol=1e-1)

    print("KERNEL_OK")
</pallas_src>

<mosaic_0001>
module attributes {stable_mosaic.version = 11 : i64} {
  func.func @_mlp_kernel(%arg0: i32, %arg1: memref<2x256xf32, #tpu.memory_space<vmem>>, %arg2: memref<256x128xf32, #tpu.memory_space<vmem>>, %arg3: memref<1x128xf32, #tpu.memory_space<vmem>>, %arg4: memref<128x128xf32, #tpu.memory_space<vmem>>, %arg5: memref<1x128xf32, #tpu.memory_space<vmem>>, %arg6: memref<2x128xf32, #tpu.memory_space<vmem>>) attributes {dimension_semantics = [#tpu.dimension_semantics<parallel>], iteration_bounds = array<i64: 1>, scalar_prefetch = 0 : i64, scratch_operands = 0 : i64, tpu.core_type = #tpu.core_type<tc>, window_params = [{transform_indices = @transform_0, window_bounds = array<i64: 2, 256>}, {pipeline_mode = #tpu.pipeline_mode<synchronous>, transform_indices = @transform_1, window_bounds = array<i64: 256, 128>}, {pipeline_mode = #tpu.pipeline_mode<synchronous>, transform_indices = @transform_2, window_bounds = array<i64: 1, 128>}, {pipeline_mode = #tpu.pipeline_mode<synchronous>, transform_indices = @transform_3, window_bounds = array<i64: 128, 128>}, {pipeline_mode = #tpu.pipeline_mode<synchronous>, transform_indices = @transform_4, window_bounds = array<i64: 1, 128>}, {transform_indices = @transform_5, window_bounds = array<i64: 2, 128>}]} {
    %c0 = arith.constant 0 : index
    %c0_0 = arith.constant 0 : index
    %0 = vector.load %arg1[%c0, %c0_0] : memref<2x256xf32, #tpu.memory_space<vmem>>, vector<2x256xf32>
    %c0_1 = arith.constant 0 : index
    %c0_2 = arith.constant 0 : index
    %1 = vector.load %arg2[%c0_1, %c0_2] : memref<256x128xf32, #tpu.memory_space<vmem>>, vector<256x128xf32>
    %cst = arith.constant dense<0.000000e+00> : vector<2x128xf32>
    %2 = tpu.matmul %0, %1, %cst {dimension_numbers = #tpu.dot_dimension_numbers<[1], [0], [0], [1], [0, 0, 1, 1], [], []>, precision = #tpu.contract_precision<fp32>} : vector<2x256xf32>, vector<256x128xf32>, vector<2x128xf32> -> vector<2x128xf32>
    %c0_3 = arith.constant 0 : index
    %c0_4 = arith.constant 0 : index
    %3 = vector.load %arg3[%c0_3, %c0_4] : memref<1x128xf32, #tpu.memory_space<vmem>>, vector<1x128xf32>
    %4 = vector.broadcast %3 : vector<1x128xf32> to vector<2x128xf32>
    %5 = arith.addf %2, %4 : vector<2x128xf32>
    %cst_5 = arith.constant 0.000000e+00 : f32
    %6 = vector.broadcast %cst_5 : f32 to vector<2x128xf32>
    %7 = arith.maximumf %5, %6 : vector<2x128xf32>
    %c0_6 = arith.constant 0 : index
    %c0_7 = arith.constant 0 : index
    %8 = vector.load %arg4[%c0_6, %c0_7] : memref<128x128xf32, #tpu.memory_space<vmem>>, vector<128x128xf32>
    %cst_8 = arith.constant dense<0.000000e+00> : vector<2x128xf32>
    %9 = tpu.matmul %7, %8, %cst_8 {dimension_numbers = #tpu.dot_dimension_numbers<[1], [0], [0], [1], [0, 0, 1, 1], [], []>, precision = #tpu.contract_precision<fp32>} : vector<2x128xf32>, vector<128x128xf32>, vector<2x128xf32> -> vector<2x128xf32>
    %c0_9 = arith.constant 0 : index
    %c0_10 = arith.constant 0 : index
    %10 = vector.load %arg5[%c0_9, %c0_10] : memref<1x128xf32, #tpu.memory_space<vmem>>, vector<1x128xf32>
    %11 = vector.broadcast %10 : vector<1x128xf32> to vector<2x128xf32>
    %12 = arith.addf %9, %11 : vector<2x128xf32>
    %c0_11 = arith.constant 0 : index
    %c0_12 = arith.constant 0 : index
    %13 = vector.load %arg6[%c0_11, %c0_12] : memref<2x128xf32, #tpu.memory_space<vmem>>, vector<2x128xf32>
    tpu.vector_store %arg6[%c0_11, %c0_12], %12 {strides = array<i32>} : memref<2x128xf32, #tpu.memory_space<vmem>>, vector<2x128xf32>,
    return
  }
  func.func @transform_0(%arg0: i32) -> (i32, i32) {
    %c0_i32 = arith.constant 0 : i32
    %c0_i32_0 = arith.constant 0 : i32
    return %arg0, %c0_i32 : i32, i32
  }
  func.func @transform_1(%arg0: i32) -> (i32, i32) {
    %c0_i32 = arith.constant 0 : i32
    %c0_i32_0 = arith.constant 0 : i32
    %c0_i32_1 = arith.constant 0 : i32
    return %c0_i32, %c0_i32_0 : i32, i32
  }
  func.func @transform_2(%arg0: i32) -> (i32, i32) {
    %c0_i32 = arith.constant 0 : i32
    %c0_i32_0 = arith.constant 0 : i32
    %c0_i32_1 = arith.constant 0 : i32
    return %c0_i32, %c0_i32_0 : i32, i32
  }
  func.func @transform_3(%arg0: i32) -> (i32, i32) {
    %c0_i32 = arith.constant 0 : i32
    %c0_i32_0 = arith.constant 0 : i32
    %c0_i32_1 = arith.constant 0 : i32
    return %c0_i32, %c0_i32_0 : i32, i32
  }
  func.func @transform_4(%arg0: i32) -> (i32, i32) {
    %c0_i32 = arith.constant 0 : i32
    %c0_i32_0 = arith.constant 0 : i32
    %c0_i32_1 = arith.constant 0 : i32
    return %c0_i32, %c0_i32_0 : i32, i32
  }
  func.func @transform_5(%arg0: i32) -> (i32, i32) {
    %c0_i32 = arith.constant 0 : i32
    %c0_i32_0 = arith.constant 0 : i32
    return %arg0, %c0_i32 : i32, i32
  }
}

</mosaic_0001>

<llo_original>
// kernel: mnist_model_forward.1
$region0: #{mnist_model_forward.1}
  #allocation0 [shape = 'u32[]', space=smem, size = 0x4, offset = 0x4, fixed_abs, tag = 'smem constant byte address 0x4 - core index']
  #allocation1 [shape = 'u32[144,128]{1,0:T(1,128)}', space=vmem, size = 0x12000, scoped, tag = 'internal scratch']
  %s0 = inlined_call_operand.vmem [shape: f32[2,256], index: 0, kind: input, shape index: {}]
  %s1 = inlined_call_operand.hbm [shape: f32[256,128], index: 1, kind: input, shape index: {}]
  %s2 = inlined_call_operand.vmem [shape: f32[1,128], index: 2, kind: input, shape index: {}]
  %s3 = inlined_call_operand.hbm [shape: f32[128,128], index: 3, kind: input, shape index: {}]
  %s4 = inlined_call_operand.vmem [shape: f32[1,128], index: 4, kind: input, shape index: {}]
  %s5 = inlined_call_operand.hbm [shape: f32[2,128], index: 5, kind: output, shape index: {}]
  %s6 = sld [smem:[#allocation0]]
  $region38: #{mnist_model_forward.1} parent=0
    _
  %s8 = ssub.s32 1, %s6
  %s9 = scalar_select 0, %s8, %s6
  $region1: #{mnist_model_forward.1} parent=0
    #allocation2 [shape = 'u8[131072]{0}', space=vmem, size = 0x20000, scoped, tag = 'input window, operand 1, single buffered']
    #allocation3 [shape = 's32[1]{0}', space=sflag, size = 0x4, scoped, tag = 'scoped memory for mnist_model_forward.1']
    #allocation4 [shape = 's32[1]{0}', space=sflag, size = 0x4, scoped, tag = 'scoped memory for mnist_model_forward.1']
    #allocation5 [shape = 'u8[65536]{0}', space=vmem, size = 0x10000, scoped, tag = 'input window, operand 3, single buffered']
    #allocation6 [shape = 's32[1]{0}', space=sflag, size = 0x4, scoped, tag = 'scoped memory for mnist_model_forward.1']
    #allocation7 [shape = 'u8[1024]{0}', space=vmem, size = 0x400, scoped, tag = 'output window, operand 0, single buffered']
    %10 = vsyncpa [#allocation3], 0
    %11 = vsyncpa [#allocation6], 0
    %12 = vsyncpa [#allocation4], 0
    // Predicated region
    $region2: #{mnist_model_forward.1} parent=1 // pred_check
      _
    $region3: #{mnist_model_forward.1} parent=1 // pred_check_branch
      %14 = sbr.rel (0) target = $region5
    $region4: #{mnist_model_forward.1} parent=1 // pred_region
      _
    $region5: #{mnist_model_forward.1} parent=1 // pred_fallthru
      _
    // Predicated region
    $region6: #{mnist_model_forward.1} parent=1 // pred_check
      _
    $region7: #{mnist_model_forward.1} parent=1 // pred_check_branch
      %16 = sbr.rel (0) target = $region9
    $region8: #{mnist_model_forward.1} parent=1 // pred_region
      %s18 = ssub.s32 4096, 4096
      %19 = vsyncadd [#allocation3], %s18
      %s20 = sshll.u32 [#allocation2], 4
      %s21 = int_to_ptr.vmem [resolvable:$true] %s20
      %26 = dma.hbm_to_vmem [thread:$0]  %s1, 4096, %s21, [#allocation3], 128, 128, 8
    $region9: #{mnist_model_forward.1} parent=1 // pred_fallthru
      _
    // Predicated region
    $region10: #{mnist_model_forward.1} parent=1 // pred_check
      _
    $region11: #{mnist_model_forward.1} parent=1 // pred_check_branch
      %28 = sbr.rel (0) target = $region13
    $region12: #{mnist_model_forward.1} parent=1 // pred_region
      _
    $region13: #{mnist_model_forward.1} parent=1 // pred_fallthru
      _
    // Predicated region
    $region14: #{mnist_model_forward.1} parent=1 // pred_check
      _
    $region15: #{mnist_model_forward.1} parent=1 // pred_check_branch
      %30 = sbr.rel (0) target = $region17
    $region16: #{mnist_model_forward.1} parent=1 // pred_region
      %s32 = ssub.s32 2048, 2048
      %33 = vsyncadd [#allocation6], %s32
      %s34 = sshll.u32 [#allocation5], 4
      %s35 = int_to_ptr.vmem [resolvable:$true] %s34
      %40 = dma.hbm_to_vmem [thread:$0]  %s3, 2048, %s35, [#allocation6], 128, 128, 8
    $region17: #{mnist_model_forward.1} parent=1 // pred_fallthru
      _
    // Predicated region
    $region18: #{mnist_model_forward.1} parent=1 // pred_check
      _
    $region19: #{mnist_model_forward.1} parent=1 // pred_check_branch
      %42 = sbr.rel (0) target = $region21
    $region20: #{mnist_model_forward.1} parent=1 // pred_region
      _
    $region21: #{mnist_model_forward.1} parent=1 // pred_fallthru
      _
    // Predicated region
    $region22: #{mnist_model_forward.1} parent=1 // pred_check
      _
    $region23: #{mnist_model_forward.1} parent=1 // pred_check_branch
      %44 = sbr.rel (0) target = $region25
    $region24: #{mnist_model_forward.1} parent=1 // pred_region
      %45 = dma.done [#allocation3], 4096
    $region25: #{mnist_model_forward.1} parent=1 // pred_fallthru
      _
    // Predicated region
    $region26: #{mnist_model_forward.1} parent=1 // pred_check
      _
    $region27: #{mnist_model_forward.1} parent=1 // pred_check_branch
      %47 = sbr.rel (0) target = $region29
    $region28: #{mnist_model_forward.1} parent=1 // pred_region
      %48 = dma.done [#allocation6], 2048
    $region29: #{mnist_model_forward.1} parent=1 // pred_fallthru
      _
    %v49 = vld [vmem:[%s0] sm:$0xf]
    %v50 = vld [vmem:[#allocation2] sm:$0xff]
    %v51 = vld [vmem:[#allocation2 + $0x8] sm:$0xff]
    %v52 = vld [vmem:[#allocation2 + $0x10] sm:$0xff]
    %v53 = vld [vmem:[#allocation2 + $0x18] sm:$0xff]
    %v54 = vld [vmem:[#allocation2 + $0x20] sm:$0xff]
    %v55 = vld [vmem:[#allocation2 + $0x28] sm:$0xff]
    %v56 = vld [vmem:[#allocation2 + $0x30] sm:$0xff]
    %v57 = vld [vmem:[#allocation2 + $0x38] sm:$0xff]
    %v58 = vld [vmem:[#allocation2 + $0x40] sm:$0xff]
    %v59 = vld [vmem:[#allocation2 + $0x48] sm:$0xff]
    %v60 = vld [vmem:[#allocation2 + $0x50] sm:$0xff]
    %v61 = vld [vmem:[#allocation2 + $0x58] sm:$0xff]
    %v62 = vld [vmem:[#allocation2 + $0x60] sm:$0xff]
    %v63 = vld [vmem:[#allocation2 + $0x68] sm:$0xff]
    %v64 = vld [vmem:[#allocation2 + $0x70] sm:$0xff]
    %v65 = vld [vmem:[#allocation2 + $0x78] sm:$0xff]
    %v66 = vld [vmem:[#allocation2 + $0x80] sm:$0xff]
    %v67 = vld [vmem:[#allocation2 + $0x88] sm:$0xff]
    %v68 = vld [vmem:[#allocation2 + $0x90] sm:$0xff]
    %v69 = vld [vmem:[#allocation2 + $0x98] sm:$0xff]
    %v70 = vld [vmem:[#allocation2 + $0xa0] sm:$0xff]
    %v71 = vld [vmem:[#allocation2 + $0xa8] sm:$0xff]
    %v72 = vld [vmem:[#allocation2 + $0xb0] sm:$0xff]
    %v73 = vld [vmem:[#allocation2 + $0xb8] sm:$0xff]
    %v74 = vld [vmem:[#allocation2 + $0xc0] sm:$0xff]
    %v75 = vld [vmem:[#allocation2 + $0xc8] sm:$0xff]
    %v76 = vld [vmem:[#allocation2 + $0xd0] sm:$0xff]
    %v77 = vld [vmem:[#allocation2 + $0xd8] sm:$0xff]
    %v78 = vld [vmem:[#allocation2 + $0xe0] sm:$0xff]
    %v79 = vld [vmem:[#allocation2 + $0xe8] sm:$0xff]
    %v80 = vld [vmem:[#allocation2 + $0xf0] sm:$0xff]
    %v81 = vld [vmem:[#allocation2 + $0xf8] sm:$0xff]
    %v82 = vld [vmem:[%s2] sm:$0x1]
    %v84 = vlaneseq
    %v85 = vshrl.u32 %v84, 7
    %v86 = vsub.s32 0, %v85
    %v87 = vrot.slane %v82, %v86
    %v91 = vunpack.c.l.s4 1983009808
    %v92 = vunpack.c.0.s8 %v91
    %v93 = vlaneseq
    %v94 = vshrl.u32 %v93, 7
    %v95 = vsub.s32 %v92, %v94
    %v96 = vrot.slane %v49, %v95
    %v97 = vcombine.high %v96, %v96
    %100 = vmatprep.subr.mxu0 0.0
    %v101 = vand.u32 %v65, 4294901760
    %102 = vmatpush1.msra.mxu0 %v101
    %103 = vmatprep.subr.mxu0 0.0
    %v104 = vand.u32 %v64, 4294901760
    %105 = vmatpush1.msra.mxu0 %v104
    %106 = vmatprep.subr.mxu0 0.0
    %v107 = vand.u32 %v63, 4294901760
    %108 = vmatpush1.msra.mxu0 %v107
    %109 = vmatprep.subr.mxu0 0.0
    %v110 = vand.u32 %v62, 4294901760
    %111 = vmatpush1.msra.mxu0 %v110
    %112 = vmatprep.subr.mxu0 0.0
    %v113 = vand.u32 %v61, 4294901760
    %114 = vmatpush1.msra.mxu0 %v113
    %115 = vmatprep.subr.mxu0 0.0
    %v116 = vand.u32 %v60, 4294901760
    %117 = vmatpush1.msra.mxu0 %v116
    %118 = vmatprep.subr.mxu0 0.0
    %v119 = vand.u32 %v59, 4294901760
    %120 = vmatpush1.msra.mxu0 %v119
    %121 = vmatprep.subr.mxu0 0.0
    %v122 = vand.u32 %v58, 4294901760
    %123 = vmatpush1.msra.mxu0 %v122
    %124 = vmatprep.subr.mxu0 0.0
    %v125 = vand.u32 %v57, 4294901760
    %126 = vmatpush1.msra.mxu0 %v125
    %127 = vmatprep.subr.mxu0 0.0
    %v128 = vand.u32 %v56, 4294901760
    %129 = vmatpush1.msra.mxu0 %v128
    %130 = vmatprep.subr.mxu0 0.0
    %v131 = vand.u32 %v55, 4294901760
    %132 = vmatpush1.msra.mxu0 %v131
    %133 = vmatprep.subr.mxu0 0.0
    %v134 = vand.u32 %v54, 4294901760
    %135 = vmatpush1.msra.mxu0 %v134
    %136 = vmatprep.subr.mxu0 0.0
    %v137 = vand.u32 %v53, 4294901760
    %138 = vmatpush1.msra.mxu0 %v137
    %139 = vmatprep.subr.mxu0 0.0
    %v140 = vand.u32 %v52, 4294901760
    %141 = vmatpush1.msra.mxu0 %v140
    %142 = vmatprep.subr.mxu0 0.0
    %v143 = vand.u32 %v51, 4294901760
    %144 = vmatpush1.msra.mxu0 %v143
    %145 = vmatprep.subr.mxu0 0.0
    %v146 = vand.u32 %v50, 4294901760
    %147 = vmatpush1.msra.mxu0 %v146
    %148 = vmatprep.subr.mxu0 0.0
    %v149 = vand.u32 %v81, 4294901760
    %150 = vmatpush2.msra.mxu0 %v149
    %151 = vmatprep.subr.mxu0 0.0
    %v152 = vand.u32 %v80, 4294901760
    %153 = vmatpush2.msra.mxu0 %v152
    %154 = vmatprep.subr.mxu0 0.0
    %v155 = vand.u32 %v79, 4294901760
    %156 = vmatpush2.msra.mxu0 %v155
    %157 = vmatprep.subr.mxu0 0.0
    %v158 = vand.u32 %v78, 4294901760
    %159 = vmatpush2.msra.mxu0 %v158
    %160 = vmatprep.subr.mxu0 0.0
    %v161 = vand.u32 %v77, 4294901760
    %162 = vmatpush2.msra.mxu0 %v161
    %163 = vmatprep.subr.mxu0 0.0
    %v164 = vand.u32 %v76, 4294901760
    %165 = vmatpush2.msra.mxu0 %v164
    %166 = vmatprep.subr.mxu0 0.0
    %v167 = vand.u32 %v75, 4294901760
    %168 = vmatpush2.msra.mxu0 %v167
    %169 = vmatprep.subr.mxu0 0.0
    %v170 = vand.u32 %v74, 4294901760
    %171 = vmatpush2.msra.mxu0 %v170
    %172 = vmatprep.subr.mxu0 0.0
    %v173 = vand.u32 %v73, 4294901760
    %174 = vmatpush2.msra.mxu0 %v173
    %175 = vmatprep.subr.mxu0 0.0
    %v176 = vand.u32 %v72, 4294901760
    %177 = vmatpush2.msra.mxu0 %v176
    %178 = vmatprep.subr.mxu0 0.0
    %v179 = vand.u32 %v71, 4294901760
    %180 = vmatpush2.msra.mxu0 %v179
    %181 = vmatprep.subr.mxu0 0.0
    %v182 = vand.u32 %v70, 4294901760
    %183 = vmatpush2.msra.mxu0 %v182
    %184 = vmatprep.subr.mxu0 0.0
    %v185 = vand.u32 %v69, 4294901760
    %186 = vmatpush2.msra.mxu0 %v185
    %187 = vmatprep.subr.mxu0 0.0
    %v188 = vand.u32 %v68, 4294901760
    %189 = vmatpush2.msra.mxu0 %v188
    %190 = vmatprep.subr.mxu0 0.0
    %v191 = vand.u32 %v67, 4294901760
    %192 = vmatpush2.msra.mxu0 %v191
    %193 = vmatprep.subr.mxu0 0.0
    %v194 = vand.u32 %v66, 4294901760
    %195 = vmatpush2.msra.mxu0 %v194
    %v196 = vand.u32 %v97, 4294901760
    %v197 = vsub.f32 %v97, %v196
    %v198 = vand.u32 %v197, 4294901760
    %v199 = vsub.f32 %v197, %v198
    %v200 = vand.u32 %v199, 4294901760
    %201 = vmatprep.mubr.f32.mxu0 %v200
    %v202 = vand.u32 %v96, 4294901760
    %v203 = vsub.f32 %v96, %v202
    %v204 = vand.u32 %v203, 4294901760
    %v205 = vsub.f32 %v203, %v204
    %v206 = vand.u32 %v205, 4294901760
    %207 = vmatmul.mubr.f32.gmra.mxu0 %v206
    %v208 = vpop.f32.mrf.mxu0
    %v209 = vadd.f32 %v87, %v208
    %v210 = vpop.f32.mrf.mxu0
    %211 = vdwg.mxu0
    %212 = vmatprep.subr.mxu0 0.0
    %v213 = vand.u32 %v65, 4294901760
    %v214 = vsub.f32 %v65, %v213
    %v215 = vand.u32 %v214, 4294901760
    %v216 = vsub.f32 %v214, %v215
    %v217 = vand.u32 %v216, 4294901760
    %218 = vmatpush1.msra.mxu0 %v217
    %219 = vmatprep.subr.mxu0 0.0
    %v220 = vand.u32 %v64, 4294901760
    %v221 = vsub.f32 %v64, %v220
    %v222 = vand.u32 %v221, 4294901760
    %v223 = vsub.f32 %v221, %v222
    %v224 = vand.u32 %v223, 4294901760
    %225 = vmatpush1.msra.mxu0 %v224
    %226 = vmatprep.subr.mxu0 0.0
    %v227 = vand.u32 %v63, 4294901760
    %v228 = vsub.f32 %v63, %v227
    %v229 = vand.u32 %v228, 4294901760
    %v230 = vsub.f32 %v228, %v229
    %v231 = vand.u32 %v230, 4294901760
    %232 = vmatpush1.msra.mxu0 %v231
    %233 = vmatprep.subr.mxu0 0.0
    %v234 = vand.u32 %v62, 4294901760
    %v235 = vsub.f32 %v62, %v234
    %v236 = vand.u32 %v235, 4294901760
    %v237 = vsub.f32 %v235, %v236
    %v238 = vand.u32 %v237, 4294901760
    %239 = vmatpush1.msra.mxu0 %v238
    %240 = vmatprep.subr.mxu0 0.0
    %v241 = vand.u32 %v61, 4294901760
    %v242 = vsub.f32 %v61, %v241
    %v243 = vand.u32 %v242, 4294901760
    %v244 = vsub.f32 %v242, %v243
    %v245 = vand.u32 %v244, 4294901760
    %246 = vmatpush1.msra.mxu0 %v245
    %247 = vmatprep.subr.mxu0 0.0
    %v248 = vand.u32 %v60, 4294901760
    %v249 = vsub.f32 %v60, %v248
    %v250 = vand.u32 %v249, 4294901760
    %v251 = vsub.f32 %v249, %v250
    %v252 = vand.u32 %v251, 4294901760
    %253 = vmatpush1.msra.mxu0 %v252
    %254 = vmatprep.subr.mxu0 0.0
    %v255 = vand.u32 %v59, 4294901760
    %v256 = vsub.f32 %v59, %v255
    %v257 = vand.u32 %v256, 4294901760
    %v258 = vsub.f32 %v256, %v257
    %v259 = vand.u32 %v258, 4294901760
    %260 = vmatpush1.msra.mxu0 %v259
    %261 = vmatprep.subr.mxu0 0.0
    %v262 = vand.u32 %v58, 4294901760
    %v263 = vsub.f32 %v58, %v262
    %v264 = vand.u32 %v263, 4294901760
    %v265 = vsub.f32 %v263, %v264
    %v266 = vand.u32 %v265, 4294901760
    %267 = vmatpush1.msra.mxu0 %v266
    %268 = vmatprep.subr.mxu0 0.0
    %v269 = vand.u32 %v57, 4294901760
    %v270 = vsub.f32 %v57, %v269
    %v271 = vand.u32 %v270, 4294901760
    %v272 = vsub.f32 %v270, %v271
    %v273 = vand.u32 %v272, 4294901760
    %274 = vmatpush1.msra.mxu0 %v273
    %275 = vmatprep.subr.mxu0 0.0
    %v276 = vand.u32 %v56, 4294901760
    %v277 = vsub.f32 %v56, %v276
    %v278 = vand.u32 %v277, 4294901760
    %v279 = vsub.f32 %v277, %v278
    %v280 = vand.u32 %v279, 4294901760
    %281 = vmatpush1.msra.mxu0 %v280
    %282 = vmatprep.subr.mxu0 0.0
    %v283 = vand.u32 %v55, 4294901760
    %v284 = vsub.f32 %v55, %v283
    %v285 = vand.u32 %v284, 4294901760
    %v286 = vsub.f32 %v284, %v285
    %v287 = vand.u32 %v286, 4294901760
    %288 = vmatpush1.msra.mxu0 %v287
    %289 = vmatprep.subr.mxu0 0.0
    %v290 = vand.u32 %v54, 4294901760
    %v291 = vsub.f32 %v54, %v290
    %v292 = vand.u32 %v291, 4294901760
    %v293 = vsub.f32 %v291, %v292
    %v294 = vand.u32 %v293, 4294901760
    %295 = vmatpush1.msra.mxu0 %v294
    %296 = vmatprep.subr.mxu0 0.0
    %v297 = vand.u32 %v53, 4294901760
    %v298 = vsub.f32 %v53, %v297
    %v299 = vand.u32 %v298, 4294901760
    %v300 = vsub.f32 %v298, %v299
    %v301 = vand.u32 %v300, 4294901760
    %302 = vmatpush1.msra.mxu0 %v301
    %303 = vmatprep.subr.mxu0 0.0
    %v304 = vand.u32 %v52, 4294901760
    %v305 = vsub.f32 %v52, %v304
    %v306 = vand.u32 %v305, 4294901760
    %v307 = vsub.f32 %v305, %v306
    %v308 = vand.u32 %v307, 4294901760
    %309 = vmatpush1.msra.mxu0 %v308
    %310 = vmatprep.subr.mxu0 0.0
    %v311 = vand.u32 %v51, 4294901760
    %v312 = vsub.f32 %v51, %v311
    %v313 = vand.u32 %v312, 4294901760
    %v314 = vsub.f32 %v312, %v313
    %v315 = vand.u32 %v314, 4294901760
    %316 = vmatpush1.msra.mxu0 %v315
    %317 = vmatprep.subr.mxu0 0.0
    %v318 = vand.u32 %v50, 4294901760
    %v319 = vsub.f32 %v50, %v318
    %v320 = vand.u32 %v319, 4294901760
    %v321 = vsub.f32 %v319, %v320
    %v322 = vand.u32 %v321, 4294901760
    %323 = vmatpush1.msra.mxu0 %v322
    %324 = vmatprep.subr.mxu0 0.0
    %v325 = vand.u32 %v81, 4294901760
    %v326 = vsub.f32 %v81, %v325
    %v327 = vand.u32 %v326, 4294901760
    %v328 = vsub.f32 %v326, %v327
    %v329 = vand.u32 %v328, 4294901760
    %330 = vmatpush2.msra.mxu0 %v329
    %331 = vmatprep.subr.mxu0 0.0
    %v332 = vand.u32 %v80, 4294901760
    %v333 = vsub.f32 %v80, %v332
    %v334 = vand.u32 %v333, 4294901760
    %v335 = vsub.f32 %v333, %v334
    %v336 = vand.u32 %v335, 4294901760
    %337 = vmatpush2.msra.mxu0 %v336
    %338 = vmatprep.subr.mxu0 0.0
    %v339 = vand.u32 %v79, 4294901760
    %v340 = vsub.f32 %v79, %v339
    %v341 = vand.u32 %v340, 4294901760
    %v342 = vsub.f32 %v340, %v341
    %v343 = vand.u32 %v342, 4294901760
    %344 = vmatpush2.msra.mxu0 %v343
    %345 = vmatprep.subr.mxu0 0.0
    %v346 = vand.u32 %v78, 4294901760
    %v347 = vsub.f32 %v78, %v346
    %v348 = vand.u32 %v347, 4294901760
    %v349 = vsub.f32 %v347, %v348
    %v350 = vand.u32 %v349, 4294901760
    %351 = vmatpush2.msra.mxu0 %v350
    %352 = vmatprep.subr.mxu0 0.0
    %v353 = vand.u32 %v77, 4294901760
    %v354 = vsub.f32 %v77, %v353
    %v355 = vand.u32 %v354, 4294901760
    %v356 = vsub.f32 %v354, %v355
    %v357 = vand.u32 %v356, 4294901760
    %358 = vmatpush2.msra.mxu0 %v357
    %359 = vmatprep.subr.mxu0 0.0
    %v360 = vand.u32 %v76, 4294901760
    %v361 = vsub.f32 %v76, %v360
    %v362 = vand.u32 %v361, 4294901760
    %v363 = vsub.f32 %v361, %v362
    %v364 = vand.u32 %v363, 4294901760
    %365 = vmatpush2.msra.mxu0 %v364
    %366 = vmatprep.subr.mxu0 0.0
    %v367 = vand.u32 %v75, 4294901760
    %v368 = vsub.f32 %v75, %v367
    %v369 = vand.u32 %v368, 4294901760
    %v370 = vsub.f32 %v368, %v369
    %v371 = vand.u32 %v370, 4294901760
    %372 = vmatpush2.msra.mxu0 %v371
    %373 = vmatprep.subr.mxu0 0.0
    %v374 = vand.u32 %v74, 4294901760
    %v375 = vsub.f32 %v74, %v374
    %v376 = vand.u32 %v375, 4294901760
    %v377 = vsub.f32 %v375, %v376
    %v378 = vand.u32 %v377, 4294901760
    %379 = vmatpush2.msra.mxu0 %v378
    %380 = vmatprep.subr.mxu0 0.0
    %v381 = vand.u32 %v73, 4294901760
    %v382 = vsub.f32 %v73, %v381
    %v383 = vand.u32 %v382, 4294901760
    %v384 = vsub.f32 %v382, %v383
    %v385 = vand.u32 %v384, 4294901760
    %386 = vmatpush2.msra.mxu0 %v385
    %387 = vmatprep.subr.mxu0 0.0
    %v388 = vand.u32 %v72, 4294901760
    %v389 = vsub.f32 %v72, %v388
    %v390 = vand.u32 %v389, 4294901760
    %v391 = vsub.f32 %v389, %v390
    %v392 = vand.u32 %v391, 4294901760
    %393 = vmatpush2.msra.mxu0 %v392
    %394 = vmatprep.subr.mxu0 0.0
    %v395 = vand.u32 %v71, 4294901760
    %v396 = vsub.f32 %v71, %v395
    %v397 = vand.u32 %v396, 4294901760
    %v398 = vsub.f32 %v396, %v397
    %v399 = vand.u32 %v398, 4294901760
    %400 = vmatpush2.msra.mxu0 %v399
    %401 = vmatprep.subr.mxu0 0.0
    %v402 = vand.u32 %v70, 4294901760
    %v403 = vsub.f32 %v70, %v402
    %v404 = vand.u32 %v403, 4294901760
    %v405 = vsub.f32 %v403, %v404
    %v406 = vand.u32 %v405, 4294901760
    %407 = vmatpush2.msra.mxu0 %v406
    %408 = vmatprep.subr.mxu0 0.0
    %v409 = vand.u32 %v69, 4294901760
    %v410 = vsub.f32 %v69, %v409
    %v411 = vand.u32 %v410, 4294901760
    %v412 = vsub.f32 %v410, %v411
    %v413 = vand.u32 %v412, 4294901760
    %414 = vmatpush2.msra.mxu0 %v413
    %415 = vmatprep.subr.mxu0 0.0
    %v416 = vand.u32 %v68, 4294901760
    %v417 = vsub.f32 %v68, %v416
    %v418 = vand.u32 %v417, 4294901760
    %v419 = vsub.f32 %v417, %v418
    %v420 = vand.u32 %v419, 4294901760
    %421 = vmatpush2.msra.mxu0 %v420
    %422 = vmatprep.subr.mxu0 0.0
    %v423 = vand.u32 %v67, 4294901760
    %v424 = vsub.f32 %v67, %v423
    %v425 = vand.u32 %v424, 4294901760
    %v426 = vsub.f32 %v424, %v425
    %v427 = vand.u32 %v426, 4294901760
    %428 = vmatpush2.msra.mxu0 %v427
    %429 = vmatprep.subr.mxu0 0.0
    %v430 = vand.u32 %v66, 4294901760
    %v431 = vsub.f32 %v66, %v430
    %v432 = vand.u32 %v431, 4294901760
    %v433 = vsub.f32 %v431, %v432
    %v434 = vand.u32 %v433, 4294901760
    %435 = vmatpush2.msra.mxu0 %v434
    %v436 = vand.u32 %v97, 4294901760
    %437 = vmatprep.mubr.f32.mxu0 %v436
    %v438 = vand.u32 %v96, 4294901760
    %439 = vmatmul.mubr.f32.gmra.mxu0 %v438
    %v440 = vpop.f32.mrf.mxu0
    %v441 = vadd.f32 %v209, %v440
    %v442 = vpop.f32.mrf.mxu0
    %443 = vdwg.mxu0
    %444 = vmatprep.subr.mxu0 0.0
    %v445 = vand.u32 %v65, 4294901760
    %v446 = vsub.f32 %v65, %v445
    %447 = vmatpush1.msra.mxu0 %v446
    %448 = vmatprep.subr.mxu0 0.0
    %v449 = vand.u32 %v64, 4294901760
    %v450 = vsub.f32 %v64, %v449
    %451 = vmatpush1.msra.mxu0 %v450
    %452 = vmatprep.subr.mxu0 0.0
    %v453 = vand.u32 %v63, 4294901760
    %v454 = vsub.f32 %v63, %v453
    %455 = vmatpush1.msra.mxu0 %v454
    %456 = vmatprep.subr.mxu0 0.0
    %v457 = vand.u32 %v62, 4294901760
    %v458 = vsub.f32 %v62, %v457
    %459 = vmatpush1.msra.mxu0 %v458
    %460 = vmatprep.subr.mxu0 0.0
    %v461 = vand.u32 %v61, 4294901760
    %v462 = vsub.f32 %v61, %v461
    %463 = vmatpush1.msra.mxu0 %v462
    %464 = vmatprep.subr.mxu0 0.0
    %v465 = vand.u32 %v60, 4294901760
    %v466 = vsub.f32 %v60, %v465
    %467 = vmatpush1.msra.mxu0 %v466
    %468 = vmatprep.subr.mxu0 0.0
    %v469 = vand.u32 %v59, 4294901760
    %v470 = vsub.f32 %v59, %v469
    %471 = vmatpush1.msra.mxu0 %v470
    %472 = vmatprep.subr.mxu0 0.0
    %v473 = vand.u32 %v58, 4294901760
    %v474 = vsub.f32 %v58, %v473
    %475 = vmatpush1.msra.mxu0 %v474
    %476 = vmatprep.subr.mxu0 0.0
    %v477 = vand.u32 %v57, 4294901760
    %v478 = vsub.f32 %v57, %v477
    %479 = vmatpush1.msra.mxu0 %v478
    %480 = vmatprep.subr.mxu0 0.0
    %v481 = vand.u32 %v56, 4294901760
    %v482 = vsub.f32 %v56, %v481
    %483 = vmatpush1.msra.mxu0 %v482
    %484 = vmatprep.subr.mxu0 0.0
    %v485 = vand.u32 %v55, 4294901760
    %v486 = vsub.f32 %v55, %v485
    %487 = vmatpush1.msra.mxu0 %v486
    %488 = vmatprep.subr.mxu0 0.0
    %v489 = vand.u32 %v54, 4294901760
    %v490 = vsub.f32 %v54, %v489
    %491 = vmatpush1.msra.mxu0 %v490
    %492 = vmatprep.subr.mxu0 0.0
    %v493 = vand.u32 %v53, 4294901760
    %v494 = vsub.f32 %v53, %v493
    %495 = vmatpush1.msra.mxu0 %v494
    %496 = vmatprep.subr.mxu0 0.0
    %v497 = vand.u32 %v52, 4294901760
    %v498 = vsub.f32 %v52, %v497
    %499 = vmatpush1.msra.mxu0 %v498
    %500 = vmatprep.subr.mxu0 0.0
    %v501 = vand.u32 %v51, 4294901760
    %v502 = vsub.f32 %v51, %v501
    %503 = vmatpush1.msra.mxu0 %v502
    %504 = vmatprep.subr.mxu0 0.0
    %v505 = vand.u32 %v50, 4294901760
    %v506 = vsub.f32 %v50, %v505
    %507 = vmatpush1.msra.mxu0 %v506
    %508 = vmatprep.subr.mxu0 0.0
    %v509 = vand.u32 %v81, 4294901760
    %v510 = vsub.f32 %v81, %v509
    %511 = vmatpush2.msra.mxu0 %v510
    %512 = vmatprep.subr.mxu0 0.0
    %v513 = vand.u32 %v80, 4294901760
    %v514 = vsub.f32 %v80, %v513
    %515 = vmatpush2.msra.mxu0 %v514
    %516 = vmatprep.subr.mxu0 0.0
    %v517 = vand.u32 %v79, 4294901760
    %v518 = vsub.f32 %v79, %v517
    %519 = vmatpush2.msra.mxu0 %v518
    %520 = vmatprep.subr.mxu0 0.0
    %v521 = vand.u32 %v78, 4294901760
    %v522 = vsub.f32 %v78, %v521
    %523 = vmatpush2.msra.mxu0 %v522
    %524 = vmatprep.subr.mxu0 0.0
    %v525 = vand.u32 %v77, 4294901760
    %v526 = vsub.f32 %v77, %v525
    %527 = vmatpush2.msra.mxu0 %v526
    %528 = vmatprep.subr.mxu0 0.0
    %v529 = vand.u32 %v76, 4294901760
    %v530 = vsub.f32 %v76, %v529
    %531 = vmatpush2.msra.mxu0 %v530
    %532 = vmatprep.subr.mxu0 0.0
    %v533 = vand.u32 %v75, 4294901760
    %v534 = vsub.f32 %v75, %v533
    %535 = vmatpush2.msra.mxu0 %v534
    %536 = vmatprep.subr.mxu0 0.0
    %v537 = vand.u32 %v74, 4294901760
    %v538 = vsub.f32 %v74, %v537
    %539 = vmatpush2.msra.mxu0 %v538
    %540 = vmatprep.subr.mxu0 0.0
    %v541 = vand.u32 %v73, 4294901760
    %v542 = vsub.f32 %v73, %v541
    %543 = vmatpush2.msra.mxu0 %v542
    %544 = vmatprep.subr.mxu0 0.0
    %v545 = vand.u32 %v72, 4294901760
    %v546 = vsub.f32 %v72, %v545
    %547 = vmatpush2.msra.mxu0 %v546
    %548 = vmatprep.subr.mxu0 0.0
    %v549 = vand.u32 %v71, 4294901760
    %v550 = vsub.f32 %v71, %v549
    %551 = vmatpush2.msra.mxu0 %v550
    %552 = vmatprep.subr.mxu0 0.0
    %v553 = vand.u32 %v70, 4294901760
    %v554 = vsub.f32 %v70, %v553
    %555 = vmatpush2.msra.mxu0 %v554
    %556 = vmatprep.subr.mxu0 0.0
    %v557 = vand.u32 %v69, 4294901760
    %v558 = vsub.f32 %v69, %v557
    %559 = vmatpush2.msra.mxu0 %v558
    %560 = vmatprep.subr.mxu0 0.0
    %v561 = vand.u32 %v68, 4294901760
    %v562 = vsub.f32 %v68, %v561
    %563 = vmatpush2.msra.mxu0 %v562
    %564 = vmatprep.subr.mxu0 0.0
    %v565 = vand.u32 %v67, 4294901760
    %v566 = vsub.f32 %v67, %v565
    %567 = vmatpush2.msra.mxu0 %v566
    %568 = vmatprep.subr.mxu0 0.0
    %v569 = vand.u32 %v66, 4294901760
    %v570 = vsub.f32 %v66, %v569
    %571 = vmatpush2.msra.mxu0 %v570
    %v572 = vand.u32 %v97, 4294901760
    %v573 = vsub.f32 %v97, %v572
    %574 = vmatprep.mubr.f32.mxu0 %v573
    %v575 = vand.u32 %v96, 4294901760
    %v576 = vsub.f32 %v96, %v575
    %577 = vmatmul.mubr.f32.gmra.mxu0 %v576
    %v578 = vpop.f32.mrf.mxu0
    %v579 = vadd.f32 %v441, %v578
    %v580 = vpop.f32.mrf.mxu0
    %581 = vdwg.mxu0
    %582 = vmatprep.subr.mxu0 0.0
    %v583 = vand.u32 %v65, 4294901760
    %584 = vmatpush1.msra.mxu0 %v583
    %585 = vmatprep.subr.mxu0 0.0
    %v586 = vand.u32 %v64, 4294901760
    %587 = vmatpush1.msra.mxu0 %v586
    %588 = vmatprep.subr.mxu0 0.0
    %v589 = vand.u32 %v63, 4294901760
    %590 = vmatpush1.msra.mxu0 %v589
    %591 = vmatprep.subr.mxu0 0.0
    %v592 = vand.u32 %v62, 4294901760
    %593 = vmatpush1.msra.mxu0 %v592
    %594 = vmatprep.subr.mxu0 0.0
    %v595 = vand.u32 %v61, 4294901760
    %596 = vmatpush1.msra.mxu0 %v595
    %597 = vmatprep.subr.mxu0 0.0
    %v598 = vand.u32 %v60, 4294901760
    %599 = vmatpush1.msra.mxu0 %v598
    %600 = vmatprep.subr.mxu0 0.0
    %v601 = vand.u32 %v59, 4294901760
    %602 = vmatpush1.msra.mxu0 %v601
    %603 = vmatprep.subr.mxu0 0.0
    %v604 = vand.u32 %v58, 4294901760
    %605 = vmatpush1.msra.mxu0 %v604
    %606 = vmatprep.subr.mxu0 0.0
    %v607 = vand.u32 %v57, 4294901760
    %608 = vmatpush1.msra.mxu0 %v607
    %609 = vmatprep.subr.mxu0 0.0
    %v610 = vand.u32 %v56, 4294901760
    %611 = vmatpush1.msra.mxu0 %v610
    %612 = vmatprep.subr.mxu0 0.0
    %v613 = vand.u32 %v55, 4294901760
    %614 = vmatpush1.msra.mxu0 %v613
    %615 = vmatprep.subr.mxu0 0.0
    %v616 = vand.u32 %v54, 4294901760
    %617 = vmatpush1.msra.mxu0 %v616
    %618 = vmatprep.subr.mxu0 0.0
    %v619 = vand.u32 %v53, 4294901760
    %620 = vmatpush1.msra.mxu0 %v619
    %621 = vmatprep.subr.mxu0 0.0
    %v622 = vand.u32 %v52, 4294901760
    %623 = vmatpush1.msra.mxu0 %v622
    %624 = vmatprep.subr.mxu0 0.0
    %v625 = vand.u32 %v51, 4294901760
    %626 = vmatpush1.msra.mxu0 %v625
    %627 = vmatprep.subr.mxu0 0.0
    %v628 = vand.u32 %v50, 4294901760
    %629 = vmatpush1.msra.mxu0 %v628
    %630 = vmatprep.subr.mxu0 0.0
    %v631 = vand.u32 %v81, 4294901760
    %632 = vmatpush2.msra.mxu0 %v631
    %633 = vmatprep.subr.mxu0 0.0
    %v634 = vand.u32 %v80, 4294901760
    %635 = vmatpush2.msra.mxu0 %v634
    %636 = vmatprep.subr.mxu0 0.0
    %v637 = vand.u32 %v79, 4294901760
    %638 = vmatpush2.msra.mxu0 %v637
    %639 = vmatprep.subr.mxu0 0.0
    %v640 = vand.u32 %v78, 4294901760
    %641 = vmatpush2.msra.mxu0 %v640
    %642 = vmatprep.subr.mxu0 0.0
    %v643 = vand.u32 %v77, 4294901760
    %644 = vmatpush2.msra.mxu0 %v643
    %645 = vmatprep.subr.mxu0 0.0
    %v646 = vand.u32 %v76, 4294901760
    %647 = vmatpush2.msra.mxu0 %v646
    %648 = vmatprep.subr.mxu0 0.0
    %v649 = vand.u32 %v75, 4294901760
    %650 = vmatpush2.msra.mxu0 %v649
    %651 = vmatprep.subr.mxu0 0.0
    %v652 = vand.u32 %v74, 4294901760
    %653 = vmatpush2.msra.mxu0 %v652
    %654 = vmatprep.subr.mxu0 0.0
    %v655 = vand.u32 %v73, 4294901760
    %656 = vmatpush2.msra.mxu0 %v655
    %657 = vmatprep.subr.mxu0 0.0
    %v658 = vand.u32 %v72, 4294901760
    %659 = vmatpush2.msra.mxu0 %v658
    %660 = vmatprep.subr.mxu0 0.0
    %v661 = vand.u32 %v71, 4294901760
    %662 = vmatpush2.msra.mxu0 %v661
    %663 = vmatprep.subr.mxu0 0.0
    %v664 = vand.u32 %v70, 4294901760
    %665 = vmatpush2.msra.mxu0 %v664
    %666 = vmatprep.subr.mxu0 0.0
    %v667 = vand.u32 %v69, 4294901760
    %668 = vmatpush2.msra.mxu0 %v667
    %669 = vmatprep.subr.mxu0 0.0
    %v670 = vand.u32 %v68, 4294901760
    %671 = vmatpush2.msra.mxu0 %v670
    %672 = vmatprep.subr.mxu0 0.0
    %v673 = vand.u32 %v67, 4294901760
    %674 = vmatpush2.msra.mxu0 %v673
    %675 = vmatprep.subr.mxu0 0.0
    %v676 = vand.u32 %v66, 4294901760
    %677 = vmatpush2.msra.mxu0 %v676
    %v678 = vand.u32 %v97, 4294901760
    %v679 = vsub.f32 %v97, %v678
    %v680 = vand.u32 %v679, 4294901760
    %681 = vmatprep.mubr.f32.mxu0 %v680
    %v682 = vand.u32 %v96, 4294901760
    %v683 = vsub.f32 %v96, %v682
    %v684 = vand.u32 %v683, 4294901760
    %685 = vmatmul.mubr.f32.gmra.mxu0 %v684
    %v686 = vpop.f32.mrf.mxu0
    %v687 = vadd.f32 %v579, %v686
    %v688 = vpop.f32.mrf.mxu0
    %689 = vdwg.mxu0
    %690 = vmatprep.subr.mxu0 0.0
    %v691 = vand.u32 %v65, 4294901760
    %v692 = vsub.f32 %v65, %v691
    %v693 = vand.u32 %v692, 4294901760
    %694 = vmatpush1.msra.mxu0 %v693
    %695 = vmatprep.subr.mxu0 0.0
    %v696 = vand.u32 %v64, 4294901760
    %v697 = vsub.f32 %v64, %v696
    %v698 = vand.u32 %v697, 4294901760
    %699 = vmatpush1.msra.mxu0 %v698
    %700 = vmatprep.subr.mxu0 0.0
    %v701 = vand.u32 %v63, 4294901760
    %v702 = vsub.f32 %v63, %v701
    %v703 = vand.u32 %v702, 4294901760
    %704 = vmatpush1.msra.mxu0 %v703
    %705 = vmatprep.subr.mxu0 0.0
    %v706 = vand.u32 %v62, 4294901760
    %v707 = vsub.f32 %v62, %v706
    %v708 = vand.u32 %v707, 4294901760
    %709 = vmatpush1.msra.mxu0 %v708
    %710 = vmatprep.subr.mxu0 0.0
    %v711 = vand.u32 %v61, 4294901760
    %v712 = vsub.f32 %v61, %v711
    %v713 = vand.u32 %v712, 4294901760
    %714 = vmatpush1.msra.mxu0 %v713
    %715 = vmatprep.subr.mxu0 0.0
    %v716 = vand.u32 %v60, 4294901760
    %v717 = vsub.f32 %v60, %v716
    %v718 = vand.u32 %v717, 4294901760
    %719 = vmatpush1.msra.mxu0 %v718
    %720 = vmatprep.subr.mxu0 0.0
    %v721 = vand.u32 %v59, 4294901760
    %v722 = vsub.f32 %v59, %v721
    %v723 = vand.u32 %v722, 4294901760
    %724 = vmatpush1.msra.mxu0 %v723
    %725 = vmatprep.subr.mxu0 0.0
    %v726 = vand.u32 %v58, 4294901760
    %v727 = vsub.f32 %v58, %v726
    %v728 = vand.u32 %v727, 4294901760
    %729 = vmatpush1.msra.mxu0 %v728
    %730 = vmatprep.subr.mxu0 0.0
    %v731 = vand.u32 %v57, 4294901760
    %v732 = vsub.f32 %v57, %v731
    %v733 = vand.u32 %v732, 4294901760
    %734 = vmatpush1.msra.mxu0 %v733
    %735 = vmatprep.subr.mxu0 0.0
    %v736 = vand.u32 %v56, 4294901760
    %v737 = vsub.f32 %v56, %v736
    %v738 = vand.u32 %v737, 4294901760
    %739 = vmatpush1.msra.mxu0 %v738
    %740 = vmatprep.subr.mxu0 0.0
    %v741 = vand.u32 %v55, 4294901760
    %v742 = vsub.f32 %v55, %v741
    %v743 = vand.u32 %v742, 4294901760
    %744 = vmatpush1.msra.mxu0 %v743
    %745 = vmatprep.subr.mxu0 0.0
    %v746 = vand.u32 %v54, 4294901760
    %v747 = vsub.f32 %v54, %v746
    %v748 = vand.u32 %v747, 4294901760
    %749 = vmatpush1.msra.mxu0 %v748
    %750 = vmatprep.subr.mxu0 0.0
    %v751 = vand.u32 %v53, 4294901760
    %v752 = vsub.f32 %v53, %v751
    %v753 = vand.u32 %v752, 4294901760
    %754 = vmatpush1.msra.mxu0 %v753
    %755 = vmatprep.subr.mxu0 0.0
    %v756 = vand.u32 %v52, 4294901760
    %v757 = vsub.f32 %v52, %v756
    %v758 = vand.u32 %v757, 4294901760
    %759 = vmatpush1.msra.mxu0 %v758
    %760 = vmatprep.subr.mxu0 0.0
    %v761 = vand.u32 %v51, 4294901760
    %v762 = vsub.f32 %v51, %v761
    %v763 = vand.u32 %v762, 4294901760
    %764 = vmatpush1.msra.mxu0 %v763
    %765 = vmatprep.subr.mxu0 0.0
    %v766 = vand.u32 %v50, 4294901760
    %v767 = vsub.f32 %v50, %v766
    %v768 = vand.u32 %v767, 4294901760
    %769 = vmatpush1.msra.mxu0 %v768
    %770 = vmatprep.subr.mxu0 0.0
    %v771 = vand.u32 %v81, 4294901760
    %v772 = vsub.f32 %v81, %v771
    %v773 = vand.u32 %v772, 4294901760
    %774 = vmatpush2.msra.mxu0 %v773
    %775 = vmatprep.subr.mxu0 0.0
    %v776 = vand.u32 %v80, 4294901760
    %v777 = vsub.f32 %v80, %v776
    %v778 = vand.u32 %v777, 4294901760
    %779 = vmatpush2.msra.mxu0 %v778
    %780 = vmatprep.subr.mxu0 0.0
    %v781 = vand.u32 %v79, 4294901760
    %v782 = vsub.f32 %v79, %v781
    %v783 = vand.u32 %v782, 4294901760
    %784 = vmatpush2.msra.mxu0 %v783
    %785 = vmatprep.subr.mxu0 0.0
    %v786 = vand.u32 %v78, 4294901760
    %v787 = vsub.f32 %v78, %v786
    %v788 = vand.u32 %v787, 4294901760
    %789 = vmatpush2.msra.mxu0 %v788
    %790 = vmatprep.subr.mxu0 0.0
    %v791 = vand.u32 %v77, 4294901760
    %v792 = vsub.f32 %v77, %v791
    %v793 = vand.u32 %v792, 4294901760
    %794 = vmatpush2.msra.mxu0 %v793
    %795 = vmatprep.subr.mxu0 0.0
    %v796 = vand.u32 %v76, 4294901760
    %v797 = vsub.f32 %v76, %v796
    %v798 = vand.u32 %v797, 4294901760
    %799 = vmatpush2.msra.mxu0 %v798
    %800 = vmatprep.subr.mxu0 0.0
    %v801 = vand.u32 %v75, 4294901760
    %v802 = vsub.f32 %v75, %v801
    %v803 = vand.u32 %v802, 4294901760
    %804 = vmatpush2.msra.mxu0 %v803
    %805 = vmatprep.subr.mxu0 0.0
    %v806 = vand.u32 %v74, 4294901760
    %v807 = vsub.f32 %v74, %v806
    %v808 = vand.u32 %v807, 4294901760
    %809 = vmatpush2.msra.mxu0 %v808
    %810 = vmatprep.subr.mxu0 0.0
    %v811 = vand.u32 %v73, 4294901760
    %v812 = vsub.f32 %v73, %v811
    %v813 = vand.u32 %v812, 4294901760
    %814 = vmatpush2.msra.mxu0 %v813
    %815 = vmatprep.subr.mxu0 0.0
    %v816 = vand.u32 %v72, 4294901760
    %v817 = vsub.f32 %v72, %v816
    %v818 = vand.u32 %v817, 4294901760
    %819 = vmatpush2.msra.mxu0 %v818
    %820 = vmatprep.subr.mxu0 0.0
    %v821 = vand.u32 %v71, 4294901760
    %v822 = vsub.f32 %v71, %v821
    %v823 = vand.u32 %v822, 4294901760
    %824 = vmatpush2.msra.mxu0 %v823
    %825 = vmatprep.subr.mxu0 0.0
    %v826 = vand.u32 %v70, 4294901760
    %v827 = vsub.f32 %v70, %v826
    %v828 = vand.u32 %v827, 4294901760
    %829 = vmatpush2.msra.mxu0 %v828
    %830 = vmatprep.subr.mxu0 0.0
    %v831 = vand.u32 %v69, 4294901760
    %v832 = vsub.f32 %v69, %v831
    %v833 = vand.u32 %v832, 4294901760
    %834 = vmatpush2.msra.mxu0 %v833
    %835 = vmatprep.subr.mxu0 0.0
    %v836 = vand.u32 %v68, 4294901760
    %v837 = vsub.f32 %v68, %v836
    %v838 = vand.u32 %v837, 4294901760
    %839 = vmatpush2.msra.mxu0 %v838
    %840 = vmatprep.subr.mxu0 0.0
    %v841 = vand.u32 %v67, 4294901760
    %v842 = vsub.f32 %v67, %v841
    %v843 = vand.u32 %v842, 4294901760
    %844 = vmatpush2.msra.mxu0 %v843
    %845 = vmatprep.subr.mxu0 0.0
    %v846 = vand.u32 %v66, 4294901760
    %v847 = vsub.f32 %v66, %v846
    %v848 = vand.u32 %v847, 4294901760
    %849 = vmatpush2.msra.mxu0 %v848
    %v850 = vand.u32 %v97, 4294901760
    %851 = vmatprep.mubr.f32.mxu0 %v850
    %v852 = vand.u32 %v96, 4294901760
    %853 = vmatmul.mubr.f32.gmra.mxu0 %v852
    %v854 = vpop.f32.mrf.mxu0
    %v855 = vadd.f32 %v687, %v854
    %v856 = vpop.f32.mrf.mxu0
    %857 = vdwg.mxu0
    %858 = vmatprep.subr.mxu0 0.0
    %v859 = vand.u32 %v65, 4294901760
    %860 = vmatpush1.msra.mxu0 %v859
    %861 = vmatprep.subr.mxu0 0.0
    %v862 = vand.u32 %v64, 4294901760
    %863 = vmatpush1.msra.mxu0 %v862
    %864 = vmatprep.subr.mxu0 0.0
    %v865 = vand.u32 %v63, 4294901760
    %866 = vmatpush1.msra.mxu0 %v865
    %867 = vmatprep.subr.mxu0 0.0
    %v868 = vand.u32 %v62, 4294901760
    %869 = vmatpush1.msra.mxu0 %v868
    %870 = vmatprep.subr.mxu0 0.0
    %v871 = vand.u32 %v61, 4294901760
    %872 = vmatpush1.msra.mxu0 %v871
    %873 = vmatprep.subr.mxu0 0.0
    %v874 = vand.u32 %v60, 4294901760
    %875 = vmatpush1.msra.mxu0 %v874
    %876 = vmatprep.subr.mxu0 0.0
    %v877 = vand.u32 %v59, 4294901760
    %878 = vmatpush1.msra.mxu0 %v877
    %879 = vmatprep.subr.mxu0 0.0
    %v880 = vand.u32 %v58, 4294901760
    %881 = vmatpush1.msra.mxu0 %v880
    %882 = vmatprep.subr.mxu0 0.0
    %v883 = vand.u32 %v57, 4294901760
    %884 = vmatpush1.msra.mxu0 %v883
    %885 = vmatprep.subr.mxu0 0.0
    %v886 = vand.u32 %v56, 4294901760
    %887 = vmatpush1.msra.mxu0 %v886
    %888 = vmatprep.subr.mxu0 0.0
    %v889 = vand.u32 %v55, 4294901760
    %890 = vmatpush1.msra.mxu0 %v889
    %891 = vmatprep.subr.mxu0 0.0
    %v892 = vand.u32 %v54, 4294901760
    %893 = vmatpush1.msra.mxu0 %v892
    %894 = vmatprep.subr.mxu0 0.0
    %v895 = vand.u32 %v53, 4294901760
    %896 = vmatpush1.msra.mxu0 %v895
    %897 = vmatprep.subr.mxu0 0.0
    %v898 = vand.u32 %v52, 4294901760
    %899 = vmatpush1.msra.mxu0 %v898
    %900 = vmatprep.subr.mxu0 0.0
    %v901 = vand.u32 %v51, 4294901760
    %902 = vmatpush1.msra.mxu0 %v901
    %903 = vmatprep.subr.mxu0 0.0
    %v904 = vand.u32 %v50, 4294901760
    %905 = vmatpush1.msra.mxu0 %v904
    %906 = vmatprep.subr.mxu0 0.0
    %v907 = vand.u32 %v81, 4294901760
    %908 = vmatpush2.msra.mxu0 %v907
    %909 = vmatprep.subr.mxu0 0.0
    %v910 = vand.u32 %v80, 4294901760
    %911 = vmatpush2.msra.mxu0 %v910
    %912 = vmatprep.subr.mxu0 0.0
    %v913 = vand.u32 %v79, 4294901760
    %914 = vmatpush2.msra.mxu0 %v913
    %915 = vmatprep.subr.mxu0 0.0
    %v916 = vand.u32 %v78, 4294901760
    %917 = vmatpush2.msra.mxu0 %v916
    %918 = vmatprep.subr.mxu0 0.0
    %v919 = vand.u32 %v77, 4294901760
    %920 = vmatpush2.msra.mxu0 %v919
    %921 = vmatprep.subr.mxu0 0.0
    %v922 = vand.u32 %v76, 4294901760
    %923 = vmatpush2.msra.mxu0 %v922
    %924 = vmatprep.subr.mxu0 0.0
    %v925 = vand.u32 %v75, 4294901760
    %926 = vmatpush2.msra.mxu0 %v925
    %927 = vmatprep.subr.mxu0 0.0
    %v928 = vand.u32 %v74, 4294901760
    %929 = vmatpush2.msra.mxu0 %v928
    %930 = vmatprep.subr.mxu0 0.0
    %v931 = vand.u32 %v73, 4294901760
    %932 = vmatpush2.msra.mxu0 %v931
    %933 = vmatprep.subr.mxu0 0.0
    %v934 = vand.u32 %v72, 4294901760
    %935 = vmatpush2.msra.mxu0 %v934
    %936 = vmatprep.subr.mxu0 0.0
    %v937 = vand.u32 %v71, 4294901760
    %938 = vmatpush2.msra.mxu0 %v937
    %939 = vmatprep.subr.mxu0 0.0
    %v940 = vand.u32 %v70, 4294901760
    %941 = vmatpush2.msra.mxu0 %v940
    %942 = vmatprep.subr.mxu0 0.0
    %v943 = vand.u32 %v69, 4294901760
    %944 = vmatpush2.msra.mxu0 %v943
    %945 = vmatprep.subr.mxu0 0.0
    %v946 = vand.u32 %v68, 4294901760
    %947 = vmatpush2.msra.mxu0 %v946
    %948 = vmatprep.subr.mxu0 0.0
    %v949 = vand.u32 %v67, 4294901760
    %950 = vmatpush2.msra.mxu0 %v949
    %951 = vmatprep.subr.mxu0 0.0
    %v952 = vand.u32 %v66, 4294901760
    %953 = vmatpush2.msra.mxu0 %v952
    %v954 = vand.u32 %v97, 4294901760
    %955 = vmatprep.mubr.f32.mxu0 %v954
    %v956 = vand.u32 %v96, 4294901760
    %957 = vmatmul.mubr.f32.gmra.mxu0 %v956
    %v958 = vpop.f32.mrf.mxu0
    %v959 = vadd.f32 %v855, %v958
    %v960 = vpop.f32.mrf.mxu0
    %961 = vdwg.mxu0
    %v962 = vmax.f32 %v959, 0.0
    %v963 = vld [vmem:[#allocation5] sm:$0xff]
    %v964 = vld [vmem:[#allocation5 + $0x8] sm:$0xff]
    %v965 = vld [vmem:[#allocation5 + $0x10] sm:$0xff]
    %v966 = vld [vmem:[#allocation5 + $0x18] sm:$0xff]
    %v967 = vld [vmem:[#allocation5 + $0x20] sm:$0xff]
    %v968 = vld [vmem:[#allocation5 + $0x28] sm:$0xff]
    %v969 = vld [vmem:[#allocation5 + $0x30] sm:$0xff]
    %v970 = vld [vmem:[#allocation5 + $0x38] sm:$0xff]
    %v971 = vld [vmem:[#allocation5 + $0x40] sm:$0xff]
    %v972 = vld [vmem:[#allocation5 + $0x48] sm:$0xff]
    %v973 = vld [vmem:[#allocation5 + $0x50] sm:$0xff]
    %v974 = vld [vmem:[#allocation5 + $0x58] sm:$0xff]
    %v975 = vld [vmem:[#allocation5 + $0x60] sm:$0xff]
    %v976 = vld [vmem:[#allocation5 + $0x68] sm:$0xff]
    %v977 = vld [vmem:[#allocation5 + $0x70] sm:$0xff]
    %v978 = vld [vmem:[#allocation5 + $0x78] sm:$0xff]
    %v979 = vld [vmem:[%s4] sm:$0x1]
    %v981 = vlaneseq
    %v982 = vshrl.u32 %v981, 7
    %v983 = vsub.s32 0, %v982
    %v984 = vrot.slane %v979, %v983
    %986 = vmatprep.subr.mxu0 0.0
    %v987 = vand.u32 %v978, 4294901760
    %988 = vmatpush1.msra.mxu0 %v987
    %989 = vmatprep.subr.mxu0 0.0
    %v990 = vand.u32 %v977, 4294901760
    %991 = vmatpush1.msra.mxu0 %v990
    %992 = vmatprep.subr.mxu0 0.0
    %v993 = vand.u32 %v976, 4294901760
    %994 = vmatpush1.msra.mxu0 %v993
    %995 = vmatprep.subr.mxu0 0.0
    %v996 = vand.u32 %v975, 4294901760
    %997 = vmatpush1.msra.mxu0 %v996
    %998 = vmatprep.subr.mxu0 0.0
    %v999 = vand.u32 %v974, 4294901760
    %1000 = vmatpush1.msra.mxu0 %v999
    %1001 = vmatprep.subr.mxu0 0.0
    %v1002 = vand.u32 %v973, 4294901760
    %1003 = vmatpush1.msra.mxu0 %v1002
    %1004 = vmatprep.subr.mxu0 0.0
    %v1005 = vand.u32 %v972, 4294901760
    %1006 = vmatpush1.msra.mxu0 %v1005
    %1007 = vmatprep.subr.mxu0 0.0
    %v1008 = vand.u32 %v971, 4294901760
    %1009 = vmatpush1.msra.mxu0 %v1008
    %1010 = vmatprep.subr.mxu0 0.0
    %v1011 = vand.u32 %v970, 4294901760
    %1012 = vmatpush1.msra.mxu0 %v1011
    %1013 = vmatprep.subr.mxu0 0.0
    %v1014 = vand.u32 %v969, 4294901760
    %1015 = vmatpush1.msra.mxu0 %v1014
    %1016 = vmatprep.subr.mxu0 0.0
    %v1017 = vand.u32 %v968, 4294901760
    %1018 = vmatpush1.msra.mxu0 %v1017
    %1019 = vmatprep.subr.mxu0 0.0
    %v1020 = vand.u32 %v967, 4294901760
    %1021 = vmatpush1.msra.mxu0 %v1020
    %1022 = vmatprep.subr.mxu0 0.0
    %v1023 = vand.u32 %v966, 4294901760
    %1024 = vmatpush1.msra.mxu0 %v1023
    %1025 = vmatprep.subr.mxu0 0.0
    %v1026 = vand.u32 %v965, 4294901760
    %1027 = vmatpush1.msra.mxu0 %v1026
    %1028 = vmatprep.subr.mxu0 0.0
    %v1029 = vand.u32 %v964, 4294901760
    %1030 = vmatpush1.msra.mxu0 %v1029
    %1031 = vmatprep.subr.mxu0 0.0
    %v1032 = vand.u32 %v963, 4294901760
    %1033 = vmatpush1.msra.mxu0 %v1032
    %1034 = vmatprep.subr.mxu0 0.0
    %1035 = vmatpush2.msra.mxu0 0.0
    %1036 = vmatprep.subr.mxu0 0.0
    %1037 = vmatpush2.msra.mxu0 0.0
    %1038 = vmatprep.subr.mxu0 0.0
    %1039 = vmatpush2.msra.mxu0 0.0
    %1040 = vmatprep.subr.mxu0 0.0
    %1041 = vmatpush2.msra.mxu0 0.0
    %1042 = vmatprep.subr.mxu0 0.0
    %1043 = vmatpush2.msra.mxu0 0.0
    %1044 = vmatprep.subr.mxu0 0.0
    %1045 = vmatpush2.msra.mxu0 0.0
    %1046 = vmatprep.subr.mxu0 0.0
    %1047 = vmatpush2.msra.mxu0 0.0
    %1048 = vmatprep.subr.mxu0 0.0
    %1049 = vmatpush2.msra.mxu0 0.0
    %1050 = vmatprep.subr.mxu0 0.0
    %1051 = vmatpush2.msra.mxu0 0.0
    %1052 = vmatprep.subr.mxu0 0.0
    %1053 = vmatpush2.msra.mxu0 0.0
    %1054 = vmatprep.subr.mxu0 0.0
    %1055 = vmatpush2.msra.mxu0 0.0
    %1056 = vmatprep.subr.mxu0 0.0
    %1057 = vmatpush2.msra.mxu0 0.0
    %1058 = vmatprep.subr.mxu0 0.0
    %1059 = vmatpush2.msra.mxu0 0.0
    %1060 = vmatprep.subr.mxu0 0.0
    %1061 = vmatpush2.msra.mxu0 0.0
    %1062 = vmatprep.subr.mxu0 0.0
    %1063 = vmatpush2.msra.mxu0 0.0
    %1064 = vmatprep.subr.mxu0 0.0
    %1065 = vmatpush2.msra.mxu0 0.0
    %1066 = vmatprep.mubr.f32.mxu0 0.0
    %v1067 = vand.u32 %v962, 4294901760
    %v1068 = vsub.f32 %v962, %v1067
    %v1069 = vand.u32 %v1068, 4294901760
    %v1070 = vsub.f32 %v1068, %v1069
    %v1071 = vand.u32 %v1070, 4294901760
    %1072 = vmatmul.mubr.f32.gmra.mxu0 %v1071
    %v1073 = vpop.f32.mrf.mxu0
    %v1074 = vadd.f32 %v984, %v1073
    %v1075 = vpop.f32.mrf.mxu0
    %1076 = vdwg.mxu0
    %1077 = vmatprep.subr.mxu0 0.0
    %v1078 = vand.u32 %v978, 4294901760
    %v1079 = vsub.f32 %v978, %v1078
    %v1080 = vand.u32 %v1079, 4294901760
    %v1081 = vsub.f32 %v1079, %v1080
    %v1082 = vand.u32 %v1081, 4294901760
    %1083 = vmatpush1.msra.mxu0 %v1082
    %1084 = vmatprep.subr.mxu0 0.0
    %v1085 = vand.u32 %v977, 4294901760
    %v1086 = vsub.f32 %v977, %v1085
    %v1087 = vand.u32 %v1086, 4294901760
    %v1088 = vsub.f32 %v1086, %v1087
    %v1089 = vand.u32 %v1088, 4294901760
    %1090 = vmatpush1.msra.mxu0 %v1089
    %1091 = vmatprep.subr.mxu0 0.0
    %v1092 = vand.u32 %v976, 4294901760
    %v1093 = vsub.f32 %v976, %v1092
    %v1094 = vand.u32 %v1093, 4294901760
    %v1095 = vsub.f32 %v1093, %v1094
    %v1096 = vand.u32 %v1095, 4294901760
    %1097 = vmatpush1.msra.mxu0 %v1096
    %1098 = vmatprep.subr.mxu0 0.0
    %v1099 = vand.u32 %v975, 4294901760
    %v1100 = vsub.f32 %v975, %v1099
    %v1101 = vand.u32 %v1100, 4294901760
    %v1102 = vsub.f32 %v1100, %v1101
    %v1103 = vand.u32 %v1102, 4294901760
    %1104 = vmatpush1.msra.mxu0 %v1103
    %1105 = vmatprep.subr.mxu0 0.0
    %v1106 = vand.u32 %v974, 4294901760
    %v1107 = vsub.f32 %v974, %v1106
    %v1108 = vand.u32 %v1107, 4294901760
    %v1109 = vsub.f32 %v1107, %v1108
    %v1110 = vand.u32 %v1109, 4294901760
    %1111 = vmatpush1.msra.mxu0 %v1110
    %1112 = vmatprep.subr.mxu0 0.0
    %v1113 = vand.u32 %v973, 4294901760
    %v1114 = vsub.f32 %v973, %v1113
    %v1115 = vand.u32 %v1114, 4294901760
    %v1116 = vsub.f32 %v1114, %v1115
    %v1117 = vand.u32 %v1116, 4294901760
    %1118 = vmatpush1.msra.mxu0 %v1117
    %1119 = vmatprep.subr.mxu0 0.0
    %v1120 = vand.u32 %v972, 4294901760
    %v1121 = vsub.f32 %v972, %v1120
    %v1122 = vand.u32 %v1121, 4294901760
    %v1123 = vsub.f32 %v1121, %v1122
    %v1124 = vand.u32 %v1123, 4294901760
    %1125 = vmatpush1.msra.mxu0 %v1124
    %1126 = vmatprep.subr.mxu0 0.0
    %v1127 = vand.u32 %v971, 4294901760
    %v1128 = vsub.f32 %v971, %v1127
    %v1129 = vand.u32 %v1128, 4294901760
    %v1130 = vsub.f32 %v1128, %v1129
    %v1131 = vand.u32 %v1130, 4294901760
    %1132 = vmatpush1.msra.mxu0 %v1131
    %1133 = vmatprep.subr.mxu0 0.0
    %v1134 = vand.u32 %v970, 4294901760
    %v1135 = vsub.f32 %v970, %v1134
    %v1136 = vand.u32 %v1135, 4294901760
    %v1137 = vsub.f32 %v1135, %v1136
    %v1138 = vand.u32 %v1137, 4294901760
    %1139 = vmatpush1.msra.mxu0 %v1138
    %1140 = vmatprep.subr.mxu0 0.0
    %v1141 = vand.u32 %v969, 4294901760
    %v1142 = vsub.f32 %v969, %v1141
    %v1143 = vand.u32 %v1142, 4294901760
    %v1144 = vsub.f32 %v1142, %v1143
    %v1145 = vand.u32 %v1144, 4294901760
    %1146 = vmatpush1.msra.mxu0 %v1145
    %1147 = vmatprep.subr.mxu0 0.0
    %v1148 = vand.u32 %v968, 4294901760
    %v1149 = vsub.f32 %v968, %v1148
    %v1150 = vand.u32 %v1149, 4294901760
    %v1151 = vsub.f32 %v1149, %v1150
    %v1152 = vand.u32 %v1151, 4294901760
    %1153 = vmatpush1.msra.mxu0 %v1152
    %1154 = vmatprep.subr.mxu0 0.0
    %v1155 = vand.u32 %v967, 4294901760
    %v1156 = vsub.f32 %v967, %v1155
    %v1157 = vand.u32 %v1156, 4294901760
    %v1158 = vsub.f32 %v1156, %v1157
    %v1159 = vand.u32 %v1158, 4294901760
    %1160 = vmatpush1.msra.mxu0 %v1159
    %1161 = vmatprep.subr.mxu0 0.0
    %v1162 = vand.u32 %v966, 4294901760
    %v1163 = vsub.f32 %v966, %v1162
    %v1164 = vand.u32 %v1163, 4294901760
    %v1165 = vsub.f32 %v1163, %v1164
    %v1166 = vand.u32 %v1165, 4294901760
    %1167 = vmatpush1.msra.mxu0 %v1166
    %1168 = vmatprep.subr.mxu0 0.0
    %v1169 = vand.u32 %v965, 4294901760
    %v1170 = vsub.f32 %v965, %v1169
    %v1171 = vand.u32 %v1170, 4294901760
    %v1172 = vsub.f32 %v1170, %v1171
    %v1173 = vand.u32 %v1172, 4294901760
    %1174 = vmatpush1.msra.mxu0 %v1173
    %1175 = vmatprep.subr.mxu0 0.0
    %v1176 = vand.u32 %v964, 4294901760
    %v1177 = vsub.f32 %v964, %v1176
    %v1178 = vand.u32 %v1177, 4294901760
    %v1179 = vsub.f32 %v1177, %v1178
    %v1180 = vand.u32 %v1179, 4294901760
    %1181 = vmatpush1.msra.mxu0 %v1180
    %1182 = vmatprep.subr.mxu0 0.0
    %v1183 = vand.u32 %v963, 4294901760
    %v1184 = vsub.f32 %v963, %v1183
    %v1185 = vand.u32 %v1184, 4294901760
    %v1186 = vsub.f32 %v1184, %v1185
    %v1187 = vand.u32 %v1186, 4294901760
    %1188 = vmatpush1.msra.mxu0 %v1187
    %1189 = vmatprep.subr.mxu0 0.0
    %1190 = vmatpush2.msra.mxu0 0.0
    %1191 = vmatprep.subr.mxu0 0.0
    %1192 = vmatpush2.msra.mxu0 0.0
    %1193 = vmatprep.subr.mxu0 0.0
    %1194 = vmatpush2.msra.mxu0 0.0
    %1195 = vmatprep.subr.mxu0 0.0
    %1196 = vmatpush2.msra.mxu0 0.0
    %1197 = vmatprep.subr.mxu0 0.0
    %1198 = vmatpush2.msra.mxu0 0.0
    %1199 = vmatprep.subr.mxu0 0.0
    %1200 = vmatpush2.msra.mxu0 0.0
    %1201 = vmatprep.subr.mxu0 0.0
    %1202 = vmatpush2.msra.mxu0 0.0
    %1203 = vmatprep.subr.mxu0 0.0
    %1204 = vmatpush2.msra.mxu0 0.0
    %1205 = vmatprep.subr.mxu0 0.0
    %1206 = vmatpush2.msra.mxu0 0.0
    %1207 = vmatprep.subr.mxu0 0.0
    %1208 = vmatpush2.msra.mxu0 0.0
    %1209 = vmatprep.subr.mxu0 0.0
    %1210 = vmatpush2.msra.mxu0 0.0
    %1211 = vmatprep.subr.mxu0 0.0
    %1212 = vmatpush2.msra.mxu0 0.0
    %1213 = vmatprep.subr.mxu0 0.0
    %1214 = vmatpush2.msra.mxu0 0.0
    %1215 = vmatprep.subr.mxu0 0.0
    %1216 = vmatpush2.msra.mxu0 0.0
    %1217 = vmatprep.subr.mxu0 0.0
    %1218 = vmatpush2.msra.mxu0 0.0
    %1219 = vmatprep.subr.mxu0 0.0
    %1220 = vmatpush2.msra.mxu0 0.0
    %1221 = vmatprep.mubr.f32.mxu0 0.0
    %v1222 = vand.u32 %v962, 4294901760
    %1223 = vmatmul.mubr.f32.gmra.mxu0 %v1222
    %v1224 = vpop.f32.mrf.mxu0
    %v1225 = vadd.f32 %v1074, %v1224
    %v1226 = vpop.f32.mrf.mxu0
    %1227 = vdwg.mxu0
    %1228 = vmatprep.subr.mxu0 0.0
    %v1229 = vand.u32 %v978, 4294901760
    %v1230 = vsub.f32 %v978, %v1229
    %1231 = vmatpush1.msra.mxu0 %v1230
    %1232 = vmatprep.subr.mxu0 0.0
    %v1233 = vand.u32 %v977, 4294901760
    %v1234 = vsub.f32 %v977, %v1233
    %1235 = vmatpush1.msra.mxu0 %v1234
    %1236 = vmatprep.subr.mxu0 0.0
    %v1237 = vand.u32 %v976, 4294901760
    %v1238 = vsub.f32 %v976, %v1237
    %1239 = vmatpush1.msra.mxu0 %v1238
    %1240 = vmatprep.subr.mxu0 0.0
    %v1241 = vand.u32 %v975, 4294901760
    %v1242 = vsub.f32 %v975, %v1241
    %1243 = vmatpush1.msra.mxu0 %v1242
    %1244 = vmatprep.subr.mxu0 0.0
    %v1245 = vand.u32 %v974, 4294901760
    %v1246 = vsub.f32 %v974, %v1245
    %1247 = vmatpush1.msra.mxu0 %v1246
    %1248 = vmatprep.subr.mxu0 0.0
    %v1249 = vand.u32 %v973, 4294901760
    %v1250 = vsub.f32 %v973, %v1249
    %1251 = vmatpush1.msra.mxu0 %v1250
    %1252 = vmatprep.subr.mxu0 0.0
    %v1253 = vand.u32 %v972, 4294901760
    %v1254 = vsub.f32 %v972, %v1253
    %1255 = vmatpush1.msra.mxu0 %v1254
    %1256 = vmatprep.subr.mxu0 0.0
    %v1257 = vand.u32 %v971, 4294901760
    %v1258 = vsub.f32 %v971, %v1257
    %1259 = vmatpush1.msra.mxu0 %v1258
    %1260 = vmatprep.subr.mxu0 0.0
    %v1261 = vand.u32 %v970, 4294901760
    %v1262 = vsub.f32 %v970, %v1261
    %1263 = vmatpush1.msra.mxu0 %v1262
    %1264 = vmatprep.subr.mxu0 0.0
    %v1265 = vand.u32 %v969, 4294901760
    %v1266 = vsub.f32 %v969, %v1265
    %1267 = vmatpush1.msra.mxu0 %v1266
    %1268 = vmatprep.subr.mxu0 0.0
    %v1269 = vand.u32 %v968, 4294901760
    %v1270 = vsub.f32 %v968, %v1269
    %1271 = vmatpush1.msra.mxu0 %v1270
    %1272 = vmatprep.subr.mxu0 0.0
    %v1273 = vand.u32 %v967, 4294901760
    %v1274 = vsub.f32 %v967, %v1273
    %1275 = vmatpush1.msra.mxu0 %v1274
    %1276 = vmatprep.subr.mxu0 0.0
    %v1277 = vand.u32 %v966, 4294901760
    %v1278 = vsub.f32 %v966, %v1277
    %1279 = vmatpush1.msra.mxu0 %v1278
    %1280 = vmatprep.subr.mxu0 0.0
    %v1281 = vand.u32 %v965, 4294901760
    %v1282 = vsub.f32 %v965, %v1281
    %1283 = vmatpush1.msra.mxu0 %v1282
    %1284 = vmatprep.subr.mxu0 0.0
    %v1285 = vand.u32 %v964, 4294901760
    %v1286 = vsub.f32 %v964, %v1285
    %1287 = vmatpush1.msra.mxu0 %v1286
    %1288 = vmatprep.subr.mxu0 0.0
    %v1289 = vand.u32 %v963, 4294901760
    %v1290 = vsub.f32 %v963, %v1289
    %1291 = vmatpush1.msra.mxu0 %v1290
    %1292 = vmatprep.subr.mxu0 0.0
    %1293 = vmatpush2.msra.mxu0 0.0
    %1294 = vmatprep.subr.mxu0 0.0
    %1295 = vmatpush2.msra.mxu0 0.0
    %1296 = vmatprep.subr.mxu0 0.0
    %1297 = vmatpush2.msra.mxu0 0.0
    %1298 = vmatprep.subr.mxu0 0.0
    %1299 = vmatpush2.msra.mxu0 0.0
    %1300 = vmatprep.subr.mxu0 0.0
    %1301 = vmatpush2.msra.mxu0 0.0
    %1302 = vmatprep.subr.mxu0 0.0
    %1303 = vmatpush2.msra.mxu0 0.0
    %1304 = vmatprep.subr.mxu0 0.0
    %1305 = vmatpush2.msra.mxu0 0.0
    %1306 = vmatprep.subr.mxu0 0.0
    %1307 = vmatpush2.msra.mxu0 0.0
    %1308 = vmatprep.subr.mxu0 0.0
    %1309 = vmatpush2.msra.mxu0 0.0
    %1310 = vmatprep.subr.mxu0 0.0
    %1311 = vmatpush2.msra.mxu0 0.0
    %1312 = vmatprep.subr.mxu0 0.0
    %1313 = vmatpush2.msra.mxu0 0.0
    %1314 = vmatprep.subr.mxu0 0.0
    %1315 = vmatpush2.msra.mxu0 0.0
    %1316 = vmatprep.subr.mxu0 0.0
    %1317 = vmatpush2.msra.mxu0 0.0
    %1318 = vmatprep.subr.mxu0 0.0
    %1319 = vmatpush2.msra.mxu0 0.0
    %1320 = vmatprep.subr.mxu0 0.0
    %1321 = vmatpush2.msra.mxu0 0.0
    %1322 = vmatprep.subr.mxu0 0.0
    %1323 = vmatpush2.msra.mxu0 0.0
    %1324 = vmatprep.mubr.f32.mxu0 0.0
    %v1325 = vand.u32 %v962, 4294901760
    %v1326 = vsub.f32 %v962, %v1325
    %1327 = vmatmul.mubr.f32.gmra.mxu0 %v1326
    %v1328 = vpop.f32.mrf.mxu0
    %v1329 = vadd.f32 %v1225, %v1328
    %v1330 = vpop.f32.mrf.mxu0
    %1331 = vdwg.mxu0
    %1332 = vmatprep.subr.mxu0 0.0
    %v1333 = vand.u32 %v978, 4294901760
    %1334 = vmatpush1.msra.mxu0 %v1333
    %1335 = vmatprep.subr.mxu0 0.0
    %v1336 = vand.u32 %v977, 4294901760
    %1337 = vmatpush1.msra.mxu0 %v1336
    %1338 = vmatprep.subr.mxu0 0.0
    %v1339 = vand.u32 %v976, 4294901760
    %1340 = vmatpush1.msra.mxu0 %v1339
    %1341 = vmatprep.subr.mxu0 0.0
    %v1342 = vand.u32 %v975, 4294901760
    %1343 = vmatpush1.msra.mxu0 %v1342
    %1344 = vmatprep.subr.mxu0 0.0
    %v1345 = vand.u32 %v974, 4294901760
    %1346 = vmatpush1.msra.mxu0 %v1345
    %1347 = vmatprep.subr.mxu0 0.0
    %v1348 = vand.u32 %v973, 4294901760
    %1349 = vmatpush1.msra.mxu0 %v1348
    %1350 = vmatprep.subr.mxu0 0.0
    %v1351 = vand.u32 %v972, 4294901760
    %1352 = vmatpush1.msra.mxu0 %v1351
    %1353 = vmatprep.subr.mxu0 0.0
    %v1354 = vand.u32 %v971, 4294901760
    %1355 = vmatpush1.msra.mxu0 %v1354
    %1356 = vmatprep.subr.mxu0 0.0
    %v1357 = vand.u32 %v970, 4294901760
    %1358 = vmatpush1.msra.mxu0 %v1357
    %1359 = vmatprep.subr.mxu0 0.0
    %v1360 = vand.u32 %v969, 4294901760
    %1361 = vmatpush1.msra.mxu0 %v1360
    %1362 = vmatprep.subr.mxu0 0.0
    %v1363 = vand.u32 %v968, 4294901760
    %1364 = vmatpush1.msra.mxu0 %v1363
    %1365 = vmatprep.subr.mxu0 0.0
    %v1366 = vand.u32 %v967, 4294901760
    %1367 = vmatpush1.msra.mxu0 %v1366
    %1368 = vmatprep.subr.mxu0 0.0
    %v1369 = vand.u32 %v966, 4294901760
    %1370 = vmatpush1.msra.mxu0 %v1369
    %1371 = vmatprep.subr.mxu0 0.0
    %v1372 = vand.u32 %v965, 4294901760
    %1373 = vmatpush1.msra.mxu0 %v1372
    %1374 = vmatprep.subr.mxu0 0.0
    %v1375 = vand.u32 %v964, 4294901760
    %1376 = vmatpush1.msra.mxu0 %v1375
    %1377 = vmatprep.subr.mxu0 0.0
    %v1378 = vand.u32 %v963, 4294901760
    %1379 = vmatpush1.msra.mxu0 %v1378
    %1380 = vmatprep.subr.mxu0 0.0
    %1381 = vmatpush2.msra.mxu0 0.0
    %1382 = vmatprep.subr.mxu0 0.0
    %1383 = vmatpush2.msra.mxu0 0.0
    %1384 = vmatprep.subr.mxu0 0.0
    %1385 = vmatpush2.msra.mxu0 0.0
    %1386 = vmatprep.subr.mxu0 0.0
    %1387 = vmatpush2.msra.mxu0 0.0
    %1388 = vmatprep.subr.mxu0 0.0
    %1389 = vmatpush2.msra.mxu0 0.0
    %1390 = vmatprep.subr.mxu0 0.0
    %1391 = vmatpush2.msra.mxu0 0.0
    %1392 = vmatprep.subr.mxu0 0.0
    %1393 = vmatpush2.msra.mxu0 0.0
    %1394 = vmatprep.subr.mxu0 0.0
    %1395 = vmatpush2.msra.mxu0 0.0
    %1396 = vmatprep.subr.mxu0 0.0
    %1397 = vmatpush2.msra.mxu0 0.0
    %1398 = vmatprep.subr.mxu0 0.0
    %1399 = vmatpush2.msra.mxu0 0.0
    %1400 = vmatprep.subr.mxu0 0.0
    %1401 = vmatpush2.msra.mxu0 0.0
    %1402 = vmatprep.subr.mxu0 0.0
    %1403 = vmatpush2.msra.mxu0 0.0
    %1404 = vmatprep.subr.mxu0 0.0
    %1405 = vmatpush2.msra.mxu0 0.0
    %1406 = vmatprep.subr.mxu0 0.0
    %1407 = vmatpush2.msra.mxu0 0.0
    %1408 = vmatprep.subr.mxu0 0.0
    %1409 = vmatpush2.msra.mxu0 0.0
    %1410 = vmatprep.subr.mxu0 0.0
    %1411 = vmatpush2.msra.mxu0 0.0
    %1412 = vmatprep.mubr.f32.mxu0 0.0
    %v1413 = vand.u32 %v962, 4294901760
    %v1414 = vsub.f32 %v962, %v1413
    %v1415 = vand.u32 %v1414, 4294901760
    %1416 = vmatmul.mubr.f32.gmra.mxu0 %v1415
    %v1417 = vpop.f32.mrf.mxu0
    %v1418 = vadd.f32 %v1329, %v1417
    %v1419 = vpop.f32.mrf.mxu0
    %1420 = vdwg.mxu0
    %1421 = vmatprep.subr.mxu0 0.0
    %v1422 = vand.u32 %v978, 4294901760
    %v1423 = vsub.f32 %v978, %v1422
    %v1424 = vand.u32 %v1423, 4294901760
    %1425 = vmatpush1.msra.mxu0 %v1424
    %1426 = vmatprep.subr.mxu0 0.0
    %v1427 = vand.u32 %v977, 4294901760
    %v1428 = vsub.f32 %v977, %v1427
    %v1429 = vand.u32 %v1428, 4294901760
    %1430 = vmatpush1.msra.mxu0 %v1429
    %1431 = vmatprep.subr.mxu0 0.0
    %v1432 = vand.u32 %v976, 4294901760
    %v1433 = vsub.f32 %v976, %v1432
    %v1434 = vand.u32 %v1433, 4294901760
    %1435 = vmatpush1.msra.mxu0 %v1434
    %1436 = vmatprep.subr.mxu0 0.0
    %v1437 = vand.u32 %v975, 4294901760
    %v1438 = vsub.f32 %v975, %v1437
    %v1439 = vand.u32 %v1438, 4294901760
    %1440 = vmatpush1.msra.mxu0 %v1439
    %1441 = vmatprep.subr.mxu0 0.0
    %v1442 = vand.u32 %v974, 4294901760
    %v1443 = vsub.f32 %v974, %v1442
    %v1444 = vand.u32 %v1443, 4294901760
    %1445 = vmatpush1.msra.mxu0 %v1444
    %1446 = vmatprep.subr.mxu0 0.0
    %v1447 = vand.u32 %v973, 4294901760
    %v1448 = vsub.f32 %v973, %v1447
    %v1449 = vand.u32 %v1448, 4294901760
    %1450 = vmatpush1.msra.mxu0 %v1449
    %1451 = vmatprep.subr.mxu0 0.0
    %v1452 = vand.u32 %v972, 4294901760
    %v1453 = vsub.f32 %v972, %v1452
    %v1454 = vand.u32 %v1453, 4294901760
    %1455 = vmatpush1.msra.mxu0 %v1454
    %1456 = vmatprep.subr.mxu0 0.0
    %v1457 = vand.u32 %v971, 4294901760
    %v1458 = vsub.f32 %v971, %v1457
    %v1459 = vand.u32 %v1458, 4294901760
    %1460 = vmatpush1.msra.mxu0 %v1459
    %1461 = vmatprep.subr.mxu0 0.0
    %v1462 = vand.u32 %v970, 4294901760
    %v1463 = vsub.f32 %v970, %v1462
    %v1464 = vand.u32 %v1463, 4294901760
    %1465 = vmatpush1.msra.mxu0 %v1464
    %1466 = vmatprep.subr.mxu0 0.0
    %v1467 = vand.u32 %v969, 4294901760
    %v1468 = vsub.f32 %v969, %v1467
    %v1469 = vand.u32 %v1468, 4294901760
    %1470 = vmatpush1.msra.mxu0 %v1469
    %1471 = vmatprep.subr.mxu0 0.0
    %v1472 = vand.u32 %v968, 4294901760
    %v1473 = vsub.f32 %v968, %v1472
    %v1474 = vand.u32 %v1473, 4294901760
    %1475 = vmatpush1.msra.mxu0 %v1474
    %1476 = vmatprep.subr.mxu0 0.0
    %v1477 = vand.u32 %v967, 4294901760
    %v1478 = vsub.f32 %v967, %v1477
    %v1479 = vand.u32 %v1478, 4294901760
    %1480 = vmatpush1.msra.mxu0 %v1479
    %1481 = vmatprep.subr.mxu0 0.0
    %v1482 = vand.u32 %v966, 4294901760
    %v1483 = vsub.f32 %v966, %v1482
    %v1484 = vand.u32 %v1483, 4294901760
    %1485 = vmatpush1.msra.mxu0 %v1484
    %1486 = vmatprep.subr.mxu0 0.0
    %v1487 = vand.u32 %v965, 4294901760
    %v1488 = vsub.f32 %v965, %v1487
    %v1489 = vand.u32 %v1488, 4294901760
    %1490 = vmatpush1.msra.mxu0 %v1489
    %1491 = vmatprep.subr.mxu0 0.0
    %v1492 = vand.u32 %v964, 4294901760
    %v1493 = vsub.f32 %v964, %v1492
    %v1494 = vand.u32 %v1493, 4294901760
    %1495 = vmatpush1.msra.mxu0 %v1494
    %1496 = vmatprep.subr.mxu0 0.0
    %v1497 = vand.u32 %v963, 4294901760
    %v1498 = vsub.f32 %v963, %v1497
    %v1499 = vand.u32 %v1498, 4294901760
    %1500 = vmatpush1.msra.mxu0 %v1499
    %1501 = vmatprep.subr.mxu0 0.0
    %1502 = vmatpush2.msra.mxu0 0.0
    %1503 = vmatprep.subr.mxu0 0.0
    %1504 = vmatpush2.msra.mxu0 0.0
    %1505 = vmatprep.subr.mxu0 0.0
    %1506 = vmatpush2.msra.mxu0 0.0
    %1507 = vmatprep.subr.mxu0 0.0
    %1508 = vmatpush2.msra.mxu0 0.0
    %1509 = vmatprep.subr.mxu0 0.0
    %1510 = vmatpush2.msra.mxu0 0.0
    %1511 = vmatprep.subr.mxu0 0.0
    %1512 = vmatpush2.msra.mxu0 0.0
    %1513 = vmatprep.subr.mxu0 0.0
    %1514 = vmatpush2.msra.mxu0 0.0
    %1515 = vmatprep.subr.mxu0 0.0
    %1516 = vmatpush2.msra.mxu0 0.0
    %1517 = vmatprep.subr.mxu0 0.0
    %1518 = vmatpush2.msra.mxu0 0.0
    %1519 = vmatprep.subr.mxu0 0.0
    %1520 = vmatpush2.msra.mxu0 0.0
    %1521 = vmatprep.subr.mxu0 0.0
    %1522 = vmatpush2.msra.mxu0 0.0
    %1523 = vmatprep.subr.mxu0 0.0
    %1524 = vmatpush2.msra.mxu0 0.0
    %1525 = vmatprep.subr.mxu0 0.0
    %1526 = vmatpush2.msra.mxu0 0.0
    %1527 = vmatprep.subr.mxu0 0.0
    %1528 = vmatpush2.msra.mxu0 0.0
    %1529 = vmatprep.subr.mxu0 0.0
    %1530 = vmatpush2.msra.mxu0 0.0
    %1531 = vmatprep.subr.mxu0 0.0
    %1532 = vmatpush2.msra.mxu0 0.0
    %1533 = vmatprep.mubr.f32.mxu0 0.0
    %v1534 = vand.u32 %v962, 4294901760
    %1535 = vmatmul.mubr.f32.gmra.mxu0 %v1534
    %v1536 = vpop.f32.mrf.mxu0
    %v1537 = vadd.f32 %v1418, %v1536
    %v1538 = vpop.f32.mrf.mxu0
    %1539 = vdwg.mxu0
    %1540 = vmatprep.subr.mxu0 0.0
    %v1541 = vand.u32 %v978, 4294901760
    %1542 = vmatpush1.msra.mxu0 %v1541
    %1543 = vmatprep.subr.mxu0 0.0
    %v1544 = vand.u32 %v977, 4294901760
    %1545 = vmatpush1.msra.mxu0 %v1544
    %1546 = vmatprep.subr.mxu0 0.0
    %v1547 = vand.u32 %v976, 4294901760
    %1548 = vmatpush1.msra.mxu0 %v1547
    %1549 = vmatprep.subr.mxu0 0.0
    %v1550 = vand.u32 %v975, 4294901760
    %1551 = vmatpush1.msra.mxu0 %v1550
    %1552 = vmatprep.subr.mxu0 0.0
    %v1553 = vand.u32 %v974, 4294901760
    %1554 = vmatpush1.msra.mxu0 %v1553
    %1555 = vmatprep.subr.mxu0 0.0
    %v1556 = vand.u32 %v973, 4294901760
    %1557 = vmatpush1.msra.mxu0 %v1556
    %1558 = vmatprep.subr.mxu0 0.0
    %v1559 = vand.u32 %v972, 4294901760
    %1560 = vmatpush1.msra.mxu0 %v1559
    %1561 = vmatprep.subr.mxu0 0.0
    %v1562 = vand.u32 %v971, 4294901760
    %1563 = vmatpush1.msra.mxu0 %v1562
    %1564 = vmatprep.subr.mxu0 0.0
    %v1565 = vand.u32 %v970, 4294901760
    %1566 = vmatpush1.msra.mxu0 %v1565
    %1567 = vmatprep.subr.mxu0 0.0
    %v1568 = vand.u32 %v969, 4294901760
    %1569 = vmatpush1.msra.mxu0 %v1568
    %1570 = vmatprep.subr.mxu0 0.0
    %v1571 = vand.u32 %v968, 4294901760
    %1572 = vmatpush1.msra.mxu0 %v1571
    %1573 = vmatprep.subr.mxu0 0.0
    %v1574 = vand.u32 %v967, 4294901760
    %1575 = vmatpush1.msra.mxu0 %v1574
    %1576 = vmatprep.subr.mxu0 0.0
    %v1577 = vand.u32 %v966, 4294901760
    %1578 = vmatpush1.msra.mxu0 %v1577
    %1579 = vmatprep.subr.mxu0 0.0
    %v1580 = vand.u32 %v965, 4294901760
    %1581 = vmatpush1.msra.mxu0 %v1580
    %1582 = vmatprep.subr.mxu0 0.0
    %v1583 = vand.u32 %v964, 4294901760
    %1584 = vmatpush1.msra.mxu0 %v1583
    %1585 = vmatprep.subr.mxu0 0.0
    %v1586 = vand.u32 %v963, 4294901760
    %1587 = vmatpush1.msra.mxu0 %v1586
    %1588 = vmatprep.subr.mxu0 0.0
    %1589 = vmatpush2.msra.mxu0 0.0
    %1590 = vmatprep.subr.mxu0 0.0
    %1591 = vmatpush2.msra.mxu0 0.0
    %1592 = vmatprep.subr.mxu0 0.0
    %1593 = vmatpush2.msra.mxu0 0.0
    %1594 = vmatprep.subr.mxu0 0.0
    %1595 = vmatpush2.msra.mxu0 0.0
    %1596 = vmatprep.subr.mxu0 0.0
    %1597 = vmatpush2.msra.mxu0 0.0
    %1598 = vmatprep.subr.mxu0 0.0
    %1599 = vmatpush2.msra.mxu0 0.0
    %1600 = vmatprep.subr.mxu0 0.0
    %1601 = vmatpush2.msra.mxu0 0.0
    %1602 = vmatprep.subr.mxu0 0.0
    %1603 = vmatpush2.msra.mxu0 0.0
    %1604 = vmatprep.subr.mxu0 0.0
    %1605 = vmatpush2.msra.mxu0 0.0
    %1606 = vmatprep.subr.mxu0 0.0
    %1607 = vmatpush2.msra.mxu0 0.0
    %1608 = vmatprep.subr.mxu0 0.0
    %1609 = vmatpush2.msra.mxu0 0.0
    %1610 = vmatprep.subr.mxu0 0.0
    %1611 = vmatpush2.msra.mxu0 0.0
    %1612 = vmatprep.subr.mxu0 0.0
    %1613 = vmatpush2.msra.mxu0 0.0
    %1614 = vmatprep.subr.mxu0 0.0
    %1615 = vmatpush2.msra.mxu0 0.0
    %1616 = vmatprep.subr.mxu0 0.0
    %1617 = vmatpush2.msra.mxu0 0.0
    %1618 = vmatprep.subr.mxu0 0.0
    %1619 = vmatpush2.msra.mxu0 0.0
    %1620 = vmatprep.mubr.f32.mxu0 0.0
    %v1621 = vand.u32 %v962, 4294901760
    %1622 = vmatmul.mubr.f32.gmra.mxu0 %v1621
    %v1623 = vpop.f32.mrf.mxu0
    %v1624 = vadd.f32 %v1537, %v1623
    %v1625 = vpop.f32.mrf.mxu0
    %1626 = vdwg.mxu0
    %1627 = vst [vmem:[#allocation7] sm:$0x3] %v1624
    // Predicated region
    $region30: #{mnist_model_forward.1} parent=1 // pred_check
      _
    $region31: #{mnist_model_forward.1} parent=1 // pred_check_branch
      %1629 = sbr.rel (0) target = $region33
    $region32: #{mnist_model_forward.1} parent=1 // pred_region
      %s1631 = ssub.s32 32, 32
      %1632 = vsyncadd [#allocation4], %s1631
      %s1634 = sshll.u32 [#allocation7], 4
      %s1635 = int_to_ptr.vmem [resolvable:$true] %s1634
      %1637 = dma.vmem_to_hbm [thread:$0]  %s1635, 32, %s5, [#allocation4]
    $region33: #{mnist_model_forward.1} parent=1 // pred_fallthru
      _
    // Predicated region
    $region34: #{mnist_model_forward.1} parent=1 // pred_check
      _
    $region35: #{mnist_model_forward.1} parent=1 // pred_check_branch
      %1639 = sbr.rel (0) target = $region37
    $region36: #{mnist_model_forward.1} parent=1 // pred_region
      %1640 = dma.done [#allocation4], 32
    $region37: #{mnist_model_forward.1} parent=1 // pred_fallthru
      _
    %1641 = vsyncpa [#allocation3], 1
    %1642 = vsyncpa [#allocation6], 1
    %1643 = vsyncpa [#allocation4], 1

</llo_original>
